<compile_context>
chip_gen: v7x
topology: tpu7x:2x2x1
jax: 0.10.0
libtpu: 0.0.40
codegen_flags: <defaults>
</compile_context>

<pallas_src>
import math

import jax
import jax.numpy as jnp
from jax import lax
from jax.experimental import pallas as pl
from jax.experimental.pallas import tpu as pltpu

# Module constants (from v2.py)
N_EMBED = 384
BLOCK_SIZE = 256      # max sequence length for the causal mask
DROPOUT_P = 0.2       # eval-mode identity (see TODO above)

# Test shapes (consistent with the module)
HEAD_SIZE = 64
BATCH = 2
SEQ = 256             # T == block_size, exercises query tiling


def _head_kernel(x_ref, wqkv_ref, o_ref, k_s, v_s):
    """Grid = (batch, query_tile); query_tile axis is sequential ("arbitrary").

    x_ref    : (1, TQ, C)  VMEM bf16 — one query tile of one batch element
    wqkv_ref : (C, 3H)     VMEM bf16 — fused [Wq^T/sqrt(C) | Wk^T | Wv^T]
    o_ref    : (1, TQ, H)  VMEM f32  — output block for this query tile
    k_s, v_s : (T, H)      VMEM bf16 scratch — keys/values projected so far;
                           persist across the query-tile axis for a batch.
    """
    qi = pl.program_id(1)
    TQ = x_ref.shape[1]
    H = o_ref.shape[2]
    TK = TQ

    # ---- Incremental fused QKV projection for this (TQ, C) tile of x. ----
    x = x_ref[0]                                                  # (TQ, C) bf16
    qkv = jnp.dot(x, wqkv_ref[...],
                  preferred_element_type=jnp.float32)             # (TQ, 3H) f32
    q = qkv[:, 0:H].astype(jnp.bfloat16)                          # pre-scaled q
    row0 = pl.multiple_of(qi * TQ, TQ)
    k_s[pl.ds(row0, TQ), :] = qkv[:, H:2 * H].astype(jnp.bfloat16)
    v_s[pl.ds(row0, TQ), :] = qkv[:, 2 * H:3 * H].astype(jnp.bfloat16)

    # Global query-row indices for this tile (hoisted out of the kv loop).
    rows = row0 + lax.broadcasted_iota(jnp.int32, (TQ, 1), 0)     # (TQ, 1)

    # ---- Flash-style online softmax over causal kv tiles [0, qi]. ----
    def body(ki, carry):
        m_prev, l_prev, acc_prev = carry
        k0 = pl.multiple_of(ki * TK, TK)
        k_blk = k_s[pl.ds(k0, TK), :]                             # (TK, H) bf16
        v_blk = v_s[pl.ds(k0, TK), :]                             # (TK, H) bf16

        # Contract last dims of q and k -> no materialized transpose.
        s = lax.dot_general(q, k_blk, (((1,), (1,)), ((), ())),
                            preferred_element_type=jnp.float32)   # (TQ, TK) f32

        # Causal mask via broadcast compare; finite -1e30 keeps exp() NaN-safe.
        cols = k0 + lax.broadcasted_iota(jnp.int32, (1, TK), 1)   # (1, TK)
        s = jnp.where(cols <= rows, s, -1e30)

        m_cur = jnp.max(s, axis=-1, keepdims=True)                # (TQ, 1)
        m_new = jnp.maximum(m_prev, m_cur)
        alpha = jnp.exp(m_prev - m_new)                           # (TQ, 1)
        p = jnp.exp(s - m_new)                                    # (TQ, TK) f32
        l_new = alpha * l_prev + jnp.sum(p, axis=-1, keepdims=True)
        acc_new = alpha * acc_prev + jnp.dot(
            p.astype(jnp.bfloat16), v_blk,
            preferred_element_type=jnp.float32)                   # (TQ, H) f32
        return m_new, l_new, acc_new

    m0 = jnp.full((TQ, 1), -jnp.inf, dtype=jnp.float32)
    l0 = jnp.zeros((TQ, 1), dtype=jnp.float32)
    a0 = jnp.zeros((TQ, H), dtype=jnp.float32)
    _, l_f, acc_f = lax.fori_loop(0, qi + 1, body, (m0, l0, a0))

    o_ref[0] = (acc_f * pl.reciprocal(l_f, approx=True)).astype(o_ref.dtype)


def head_forward(x, w_key, w_query, w_value, *, q_tile=128):
    """x: (B, T, C) f32; w_*: PyTorch Linear layout (head_size, n_embed), f32."""
    B, T, C = x.shape
    H = w_key.shape[0]
    TQ = min(q_tile, T)
    assert T % TQ == 0 and TQ % 8 == 0, (T, TQ)

    # The module divides by C ** 0.5 with C = n_embed (not head_size) —
    # intentional, matches the PyTorch reference.  Fold it into the q weights.
    scale = 1.0 / math.sqrt(C)
    w_qkv = jnp.concatenate(
        [w_query.T * scale, w_key.T, w_value.T], axis=1).astype(jnp.bfloat16)
    x_bf16 = x.astype(jnp.bfloat16)

    return pl.pallas_call(
        _head_kernel,
        out_shape=jax.ShapeDtypeStruct((B, T, H), x.dtype),
        grid_spec=pltpu.PrefetchScalarGridSpec(
            num_scalar_prefetch=0,
            grid=(B, T // TQ),
            in_specs=[
                pl.BlockSpec((1, TQ, C), lambda b, q: (b, q, 0)),
                pl.BlockSpec((C, 3 * H), lambda b, q: (0, 0)),
            ],
            out_specs=pl.BlockSpec((1, TQ, H), lambda b, q: (b, q, 0)),
            scratch_shapes=[
                pltpu.VMEM((T, H), jnp.bfloat16),   # k scratch
                pltpu.VMEM((T, H), jnp.bfloat16),   # v scratch
            ],
        ),
        compiler_params=pltpu.CompilerParams(
            dimension_semantics=("parallel", "arbitrary"),
        ),
    )(x_bf16, w_qkv)


def head_reference(x, w_key, w_query, w_value):
    """Pure-JAX f32 reference mirroring the PyTorch forward (eval mode)."""
    B, T, C = x.shape
    k = x @ w_key.T
    q = x @ w_query.T
    v = x @ w_value.T
    wei = q @ jnp.swapaxes(k, -1, -2) / math.sqrt(C)
    tril = jnp.tril(jnp.ones((T, T), dtype=bool))
    wei = jnp.where(tril, wei, -jnp.inf)
    wei = jax.nn.softmax(wei, axis=-1)
    return wei @ v


if __name__ == "__main__":
    key = jax.random.PRNGKey(0)
    k_x, k_wk, k_wq, k_wv = jax.random.split(key, 4)

    x = jax.random.normal(k_x, (BATCH, SEQ, N_EMBED), dtype=jnp.float32)

    # Deterministic "Kaiming-uniform-like" init, PyTorch Linear weight layout:
    # (out_features=head_size, in_features=n_embed), no bias.
    bound = 1.0 / math.sqrt(N_EMBED)
    w_key_p = jax.random.uniform(k_wk, (HEAD_SIZE, N_EMBED), jnp.float32, -bound, bound)
    w_query_p = jax.random.uniform(k_wq, (HEAD_SIZE, N_EMBED), jnp.float32, -bound, bound)
    w_value_p = jax.random.uniform(k_wv, (HEAD_SIZE, N_EMBED), jnp.float32, -bound, bound)

    out = head_forward(x, w_key_p, w_query_p, w_value_p)
    out = jax.block_until_ready(out)

    ref = head_reference(x, w_key_p, w_query_p, w_value_p)
    assert out.shape == (BATCH, SEQ, HEAD_SIZE), out.shape
    # bf16 MXU operands (f32 accumulation) + approx reciprocal => relaxed tol.
    max_err = float(jnp.max(jnp.abs(out - ref)))
    assert jnp.allclose(out, ref, atol=3e-2, rtol=3e-2), max_err

    print("KERNEL_OK")
</pallas_src>

<mosaic_0001>
module attributes {stable_mosaic.version = 11 : i64} {
  func.func @_head_kernel(%arg0: i32, %arg1: i32, %arg2: memref<1x128x384xbf16, #tpu.memory_space<vmem>>, %arg3: memref<384x192xbf16, #tpu.memory_space<vmem>>, %arg4: memref<1x128x64xf32, #tpu.memory_space<vmem>>, %arg5: memref<256x64xbf16, #tpu.memory_space<vmem>>, %arg6: memref<256x64xbf16, #tpu.memory_space<vmem>>) attributes {dimension_semantics = [#tpu.dimension_semantics<parallel>, #tpu.dimension_semantics<arbitrary>], iteration_bounds = array<i64: 2, 2>, scalar_prefetch = 0 : i64, scratch_operands = 2 : i64, tpu.core_type = #tpu.core_type<tc>, window_params = [{transform_indices = @transform_0, window_bounds = array<i64: 1, 128, 384>}, {pipeline_mode = #tpu.pipeline_mode<synchronous>, transform_indices = @transform_1, window_bounds = array<i64: 384, 192>}, {transform_indices = @transform_2, window_bounds = array<i64: 1, 128, 64>}]} {
    %c0 = arith.constant 0 : index
    %c0_0 = arith.constant 0 : index
    %c0_1 = arith.constant 0 : index
    %0 = vector.load %arg2[%c0, %c0_0, %c0_1] : memref<1x128x384xbf16, #tpu.memory_space<vmem>>, vector<1x128x384xbf16>
    %1 = vector.shape_cast %0 : vector<1x128x384xbf16> to vector<128x384xbf16>
    %c0_2 = arith.constant 0 : index
    %c0_3 = arith.constant 0 : index
    %2 = vector.load %arg3[%c0_2, %c0_3] : memref<384x192xbf16, #tpu.memory_space<vmem>>, vector<384x192xbf16>
    %cst = arith.constant dense<0.000000e+00> : vector<128x192xf32>
    %3 = tpu.matmul %1, %2, %cst {dimension_numbers = #tpu.dot_dimension_numbers<[1], [0], [0], [1], [0, 0, 1, 1], [], []>} : vector<128x384xbf16>, vector<384x192xbf16>, vector<128x192xf32> -> vector<128x192xf32>
    %4 = vector.extract_strided_slice %3 {offsets = [0, 0], sizes = [128, 64], strides = [1, 1]} : vector<128x192xf32> to vector<128x64xf32>
    %5 = arith.truncf %4 : vector<128x64xf32> to vector<128x64xbf16>
    %c128_i32 = arith.constant 128 : i32
    %6 = arith.muli %arg1, %c128_i32 : i32
    %7 = tpu.assume_multiple %6, 128 : i32
    %8 = vector.extract_strided_slice %3 {offsets = [0, 64], sizes = [128, 64], strides = [1, 1]} : vector<128x192xf32> to vector<128x64xf32>
    %9 = arith.truncf %8 : vector<128x64xf32> to vector<128x64xbf16>
    %10 = arith.index_cast %7 : i32 to index
    %c0_4 = arith.constant 0 : index
    %11 = vector.load %arg5[%10, %c0_4] : memref<256x64xbf16, #tpu.memory_space<vmem>>, vector<128x64xbf16>
    tpu.vector_store %arg5[%10, %c0_4], %9 {strides = array<i32>} : memref<256x64xbf16, #tpu.memory_space<vmem>>, vector<128x64xbf16>,
    %12 = vector.extract_strided_slice %3 {offsets = [0, 128], sizes = [128, 64], strides = [1, 1]} : vector<128x192xf32> to vector<128x64xf32>
    %13 = arith.truncf %12 : vector<128x64xf32> to vector<128x64xbf16>
    %14 = arith.index_cast %7 : i32 to index
    %c0_5 = arith.constant 0 : index
    %15 = vector.load %arg6[%14, %c0_5] : memref<256x64xbf16, #tpu.memory_space<vmem>>, vector<128x64xbf16>
    tpu.vector_store %arg6[%14, %c0_5], %13 {strides = array<i32>} : memref<256x64xbf16, #tpu.memory_space<vmem>>, vector<128x64xbf16>,
    %16 = tpu.iota {dimensions = array<i32: 0>} : vector<128x1xi32>
    %17 = vector.broadcast %7 : i32 to vector<128x1xi32>
    %18 = arith.addi %17, %16 : vector<128x1xi32>
    %cst_6 = arith.constant 0xFF800000 : f32
    %19 = vector.broadcast %cst_6 : f32 to vector<128x1xf32>
    %cst_7 = arith.constant 0.000000e+00 : f32
    %20 = vector.broadcast %cst_7 : f32 to vector<128x1xf32>
    %cst_8 = arith.constant 0.000000e+00 : f32
    %21 = vector.broadcast %cst_8 : f32 to vector<128x64xf32>
    %c1_i32 = arith.constant 1 : i32
    %22 = arith.addi %arg1, %c1_i32 : i32
    %c0_i32 = arith.constant 0 : i32
    %23 = arith.subi %22, %c0_i32 : i32
    %24 = arith.addi %c0_i32, %23 : i32
    %c1_i32_9 = arith.constant 1 : i32
    %25:3 = scf.for %arg7 = %c0_i32 to %24 step %c1_i32_9 iter_args(%arg8 = %19, %arg9 = %20, %arg10 = %21) -> (vector<128x1xf32>, vector<128x1xf32>, vector<128x64xf32>)  : i32 {
      %c128_i32_13 = arith.constant 128 : i32
      %32 = arith.muli %arg7, %c128_i32_13 : i32
      %33 = tpu.assume_multiple %32, 128 : i32
      %34 = arith.index_cast %33 : i32 to index
      %c0_14 = arith.constant 0 : index
      %35 = vector.load %arg5[%34, %c0_14] : memref<256x64xbf16, #tpu.memory_space<vmem>>, vector<128x64xbf16>
      %36 = arith.index_cast %33 : i32 to index
      %c0_15 = arith.constant 0 : index
      %37 = vector.load %arg6[%36, %c0_15] : memref<256x64xbf16, #tpu.memory_space<vmem>>, vector<128x64xbf16>
      %cst_16 = arith.constant dense<0.000000e+00> : vector<128x128xf32>
      %38 = tpu.matmul %5, %35, %cst_16 {dimension_numbers = #tpu.dot_dimension_numbers<[1], [1], [0], [0], [0, 0, 1, 0], [], []>} : vector<128x64xbf16>, vector<128x64xbf16>, vector<128x128xf32> -> vector<128x128xf32>
      %39 = tpu.iota {dimensions = array<i32: 1>} : vector<1x128xi32>
      %40 = vector.broadcast %33 : i32 to vector<1x128xi32>
      %41 = arith.addi %40, %39 : vector<1x128xi32>
      %42 = vector.broadcast %41 : vector<1x128xi32> to vector<128x128xi32>
      %43 = vector.broadcast %18 : vector<128x1xi32> to vector<128x128xi32>
      %44 = arith.cmpi sle, %42, %43 : vector<128x128xi32>
      %cst_17 = arith.constant -1.000000e+30 : f32
      %45 = vector.broadcast %cst_17 : f32 to vector<128x128xf32>
      %46 = arith.select %44, %38, %45 : vector<128x128xi1>, vector<128x128xf32>
      %cst_18 = arith.constant dense<0xFF800000> : vector<128xf32>
      %47 = vector.multi_reduction <maximumf>, %46, %cst_18 [1] : vector<128x128xf32> to vector<128xf32>
      %48 = vector.shape_cast %47 : vector<128xf32> to vector<128x1xf32>
      %49 = arith.maximumf %arg8, %48 : vector<128x1xf32>
      %50 = arith.subf %arg8, %49 : vector<128x1xf32>
      %51 = math.exp %50 : vector<128x1xf32>
      %52 = vector.broadcast %49 : vector<128x1xf32> to vector<128x128xf32>
      %53 = arith.subf %46, %52 : vector<128x128xf32>
      %54 = math.exp %53 : vector<128x128xf32>
      %55 = arith.mulf %51, %arg9 : vector<128x1xf32>
      %cst_19 = arith.constant dense<0.000000e+00> : vector<128xf32>
      %56 = vector.multi_reduction <add>, %54, %cst_19 [1] : vector<128x128xf32> to vector<128xf32>
      %57 = vector.shape_cast %56 : vector<128xf32> to vector<128x1xf32>
      %58 = arith.addf %55, %57 : vector<128x1xf32>
      %59 = vector.broadcast %51 : vector<128x1xf32> to vector<128x64xf32>
      %60 = arith.mulf %59, %arg10 : vector<128x64xf32>
      %61 = arith.truncf %54 : vector<128x128xf32> to vector<128x128xbf16>
      %cst_20 = arith.constant dense<0.000000e+00> : vector<128x64xf32>
      %62 = tpu.matmul %61, %37, %cst_20 {dimension_numbers = #tpu.dot_dimension_numbers<[1], [0], [0], [1], [0, 0, 1, 1], [], []>} : vector<128x128xbf16>, vector<128x64xbf16>, vector<128x64xf32> -> vector<128x64xf32>
      %63 = arith.addf %60, %62 : vector<128x64xf32>
      scf.yield %49, %58, %63 : vector<128x1xf32>, vector<128x1xf32>, vector<128x64xf32>
    }
    %26 = tpu.reciprocal %25#1 {approx = true} : vector<128x1xf32> -> vector<128x1xf32>
    %27 = vector.broadcast %26 : vector<128x1xf32> to vector<128x64xf32>
    %28 = arith.mulf %25#2, %27 : vector<128x64xf32>
    %c0_10 = arith.constant 0 : index
    %c0_11 = arith.constant 0 : index
    %c0_12 = arith.constant 0 : index
    %29 = vector.load %arg4[%c0_10, %c0_11, %c0_12] : memref<1x128x64xf32, #tpu.memory_space<vmem>>, vector<1x128x64xf32>
    %30 = vector.shape_cast %29 : vector<1x128x64xf32> to vector<128x64xf32>
    %31 = vector.shape_cast %28 : vector<128x64xf32> to vector<1x128x64xf32>
    tpu.vector_store %arg4[%c0_10, %c0_11, %c0_12], %31 {strides = array<i32>} : memref<1x128x64xf32, #tpu.memory_space<vmem>>, vector<1x128x64xf32>,
    return
  }
  func.func @transform_0(%arg0: i32, %arg1: i32) -> (i32, i32, i32) {
    %c0_i32 = arith.constant 0 : i32
    %c0_i32_0 = arith.constant 0 : i32
    return %arg0, %arg1, %c0_i32 : i32, i32, i32
  }
  func.func @transform_1(%arg0: i32, %arg1: i32) -> (i32, i32) {
    %c0_i32 = arith.constant 0 : i32
    %c0_i32_0 = arith.constant 0 : i32
    %c0_i32_1 = arith.constant 0 : i32
    return %c0_i32, %c0_i32_0 : i32, i32
  }
  func.func @transform_2(%arg0: i32, %arg1: i32) -> (i32, i32, i32) {
    %c0_i32 = arith.constant 0 : i32
    %c0_i32_0 = arith.constant 0 : i32
    return %arg0, %arg1, %c0_i32 : i32, i32, i32
  }
}

</mosaic_0001>

<llo_original>
// kernel: tpu_custom_call.1
$region0: #{tpu_custom_call.1}
  #allocation0 [shape = 'u32[]', space=smem, size = 0x4, offset = 0x4, fixed_abs, tag = 'smem constant byte address 0x4 - core index']
  #allocation1 [shape = 'u32[144,128]{1,0:T(1,128)}', space=vmem, size = 0x12000, scoped, tag = 'internal scratch']
  #allocation2 [shape = 'bf16[256,64]{1,0:T(16,128)(2,1)}', space=vmem, size = 0x10000, scoped, tag = 'scratch operand']
  #allocation3 [shape = 'bf16[256,64]{1,0:T(16,128)(2,1)}', space=vmem, size = 0x10000, scoped, tag = 'scratch operand']
  %s0 = inlined_call_operand.hbm [shape: bf16[2,256,384], index: 0, kind: input, shape index: {}]
  %s1 = inlined_call_operand.vmem [shape: bf16[384,192], index: 1, kind: input, shape index: {}]
  %s2 = inlined_call_operand.vmem [shape: f32[2,256,64], index: 2, kind: output, shape index: {}]
  %s3 = sld [smem:[#allocation0]]
  $region52: #{tpu_custom_call.1} parent=0
    _
  %s5 = ssub.s32 1, %s3
  %s6 = scalar_select 0, %s5, %s3
  $region1: #{tpu_custom_call.1} parent=0
    #allocation4 [shape = 'u8[196608]{0}', space=vmem, size = 0x30000, scoped, tag = 'input window, operand 0']
    #allocation5 [shape = 's32[2]{0}', space=sflag, size = 0x8, scoped, tag = 'scoped memory for tpu_custom_call.1']
    %7 = vsyncpa [#allocation5], 0
    %s8 = scalar_lea.sflag [#allocation5], 1
    %9 = vsyncpa %s8, 0
    loop: start=0, step=1, limit=6
    $region2: #{tpu_custom_call.1} parent=1 // loop_pre_header
      _
    $region3: #{tpu_custom_call.1} parent=1 // loop_header
      %s11 = sphi 0, %s15
      %p12 = scmp.ge.s32.totalorder %s11, 6
      %s18 = sphi 0, %s30
      %s19 = sphi 0, %s26
      %s20 = sphi 0, %s18
      %s21 = sphi 0, %s19
      %s22 = sphi 0, %s20
      %s23 = sphi 0, %s21
      %s35 = sphi 0, %s37
      %s38 = sphi 0, %s35
      %s39 = sphi 0, %s38
      %s55 = sphi 0, %s39
      %s59 = sphi 0, %s59
      %s61 = sphi 0, %s59
      %s62 = sphi 0, %s61
      %s76 = sphi 0, %s62
      %s84 = sphi 0, %s86
      %s87 = sphi 0, %s84
      %s88 = sphi 0, %s87
      %s104 = sphi 0, %s88
    $region4: #{tpu_custom_call.1} parent=1 // loop_header_branch
      %14 = sbr.rel (%p12) target = $region8
    $region5: #{tpu_custom_call.1} parent=1 // loop_body
      %s16 = ssub.s32 %s11, 1
      %s17 = ssub.s32 %s11, 2
      %s24 = sadd.s32 1, %s19
      %p25 = scmp.ge.s32.totalorder %s24, 2
      %s26 = scalar_select %p25, 0, %s24
      %s27 = sadd.s32 1, %s18
      %s28 = scalar_select %p25, %s27, %s18
      %p29 = scmp.ge.s32.totalorder %s28, 2
      %s30 = scalar_select %p29, 0, %s28
      %s31 = ssub.s32 %s18, %s30
      %s32 = ssub.s32 %s19, %s26
      %s33 = sor.u32 %s31, %s32
      %p34 = scmp.eq.s32.totalorder %s33, 0
      %s36 = sadd.s32 %s35, 1
      %s37 = scalar_select %p34, %s35, %s36
      %p40 = pneg %p34
      %p41 = scmp.eq.s32.totalorder %s11, 3
      %p42 = por %p40, %p41
      %p43 = scmp.ne.s32.totalorder %s35, %s38
      %p44 = scmp.eq.s32.totalorder %s11, 0
      %p45 = por %p43, %p44
      %p46 = scmp.ne.s32.totalorder %s35, %s38
      %p47 = scmp.eq.s32.totalorder %s16, 3
      %p48 = por %p46, %p47
      %p49 = scmp.ne.s32.totalorder %s38, %s39
      %p50 = scmp.eq.s32.totalorder %s16, 0
      %p51 = por %p49, %p50
      %p52 = scmp.ne.s32.totalorder %s38, %s39
      %p53 = scmp.eq.s32.totalorder %s17, 3
      %p54 = por %p52, %p53
      %p56 = scmp.ne.s32.totalorder %s39, %s55
      %p57 = scmp.eq.s32.totalorder %s17, 0
      %p58 = por %p56, %p57
      %s60 = sadd.s32 %s59, 1
      %p63 = scmp.eq.s32.totalorder %s11, 3
      %p64 = scmp.ne.s32.totalorder %s59, %s61
      %p65 = scmp.eq.s32.totalorder %s11, 0
      %p66 = por %p64, %p65
      %p67 = scmp.ne.s32.totalorder %s59, %s61
      %p68 = scmp.eq.s32.totalorder %s16, 3
      %p69 = por %p67, %p68
      %p70 = scmp.ne.s32.totalorder %s61, %s62
      %p71 = scmp.eq.s32.totalorder %s16, 0
      %p72 = por %p70, %p71
      %p73 = scmp.ne.s32.totalorder %s61, %s62
      %p74 = scmp.eq.s32.totalorder %s17, 3
      %p75 = por %p73, %p74
      %p77 = scmp.ne.s32.totalorder %s62, %s76
      %p78 = scmp.eq.s32.totalorder %s17, 0
      %p79 = por %p77, %p78
      %s80 = ssub.s32 %s18, %s30
      %s81 = ssub.s32 %s19, %s26
      %s82 = sor.u32 %s80, %s81
      %p83 = scmp.eq.s32.totalorder %s82, 0
      %s85 = sadd.s32 %s84, 1
      %s86 = scalar_select %p83, %s84, %s85
      %p89 = pneg %p83
      %p90 = scmp.eq.s32.totalorder %s11, 3
      %p91 = por %p89, %p90
      %p92 = scmp.ne.s32.totalorder %s84, %s87
      %p93 = scmp.eq.s32.totalorder %s11, 0
      %p94 = por %p92, %p93
      %p95 = scmp.ne.s32.totalorder %s84, %s87
      %p96 = scmp.eq.s32.totalorder %s16, 3
      %p97 = por %p95, %p96
      %p98 = scmp.ne.s32.totalorder %s87, %s88
      %p99 = scmp.eq.s32.totalorder %s16, 0
      %p100 = por %p98, %p99
      %p101 = scmp.ne.s32.totalorder %s87, %s88
      %p102 = scmp.eq.s32.totalorder %s17, 3
      %p103 = por %p101, %p102
      %p105 = scmp.ne.s32.totalorder %s88, %s104
      %p106 = scmp.eq.s32.totalorder %s17, 0
      %p107 = por %p105, %p106
      %p108 = scmp.le.s32.totalorder 1, %s11
      %p109 = scmp.lt.s32.totalorder %s11, 5
      %p110 = pnand %p108, %p109
      %p111 = pneg %p110
      // Predicated region
      $region9: #{tpu_custom_call.1} parent=5 // pred_check
        _
      $region10: #{tpu_custom_call.1} parent=5 // pred_check_branch
        %113 = sbr.rel (%p110) target = $region12
      $region11: #{tpu_custom_call.1} parent=5 // pred_region
        %s114 = ssub.s32 %s11, 1
        // Predicated region
        $region13: #{tpu_custom_call.1} parent=11 // pred_check
          %p115 = pneg %p72
        $region14: #{tpu_custom_call.1} parent=11 // pred_check_branch
          %117 = sbr.rel (%p115) target = $region16
        $region15: #{tpu_custom_call.1} parent=11 // pred_region
          _
        $region16: #{tpu_custom_call.1} parent=11 // pred_fallthru
          _
      $region12: #{tpu_custom_call.1} parent=5 // pred_fallthru
        _
      %p118 = scmp.lt.s32.totalorder %s11, 4
      // Predicated region
      $region17: #{tpu_custom_call.1} parent=5 // pred_check
        %p119 = pneg %p118
      $region18: #{tpu_custom_call.1} parent=5 // pred_check_branch
        %121 = sbr.rel (%p119) target = $region20
      $region19: #{tpu_custom_call.1} parent=5 // pred_region
        // Predicated region
        $region21: #{tpu_custom_call.1} parent=19 // pred_check
          %p122 = pneg %p45
        $region22: #{tpu_custom_call.1} parent=19 // pred_check_branch
          %124 = sbr.rel (%p122) target = $region24
        $region23: #{tpu_custom_call.1} parent=19 // pred_region
          %s125 = sand.u32 %s35, 1
          %s126 = scalar_lea.sflag [#allocation5], %s125
          %s127 = sand.u32 %s35, 1
          %s128 = smul.addr %s127, 192
          %s129 = scalar_lea.vmem [#allocation4], %s128
          %s130 = smul.u32 16, %s19
          %s132 = ssub.s32 3072, 3072
          %133 = vsyncadd %s126, %s132
          %s134 = smul.addr %s130, 3
          %s135 = smul.addr %s18, 96
          %s136 = sadd.s32 %s134, %s135
          %s137 = smul.addr %s136, 64
          %s138 = scalar_lea.hbm %s0, %s137
          %s139 = sshll.u32 %s129, 4
          %s140 = int_to_ptr.vmem [resolvable:$true] %s139
          %145 = dma.hbm_to_vmem [thread:$0]  %s138, 3072, %s140, %s126, 192, 192, 12
        $region24: #{tpu_custom_call.1} parent=19 // pred_fallthru
          _
      $region20: #{tpu_custom_call.1} parent=5 // pred_fallthru
        _
      %p146 = scmp.le.s32.totalorder 1, %s11
      %p147 = scmp.lt.s32.totalorder %s11, 5
      %p148 = pnand %p146, %p147
      %p149 = pneg %p148
      // Predicated region
      $region25: #{tpu_custom_call.1} parent=5 // pred_check
        _
      $region26: #{tpu_custom_call.1} parent=5 // pred_check_branch
        %151 = sbr.rel (%p148) target = $region28
      $region27: #{tpu_custom_call.1} parent=5 // pred_region
        %s152 = ssub.s32 %s11, 1
        %s153 = sand.u32 %s38, 1
        %s154 = scalar_lea.sflag [#allocation5], %s153
        %s155 = sand.u32 %s38, 1
        %s156 = smul.addr %s155, 192
        %s157 = scalar_lea.vmem [#allocation4], %s156
        // Predicated region
        $region29: #{tpu_custom_call.1} parent=27 // pred_check
          %p158 = pneg %p51
        $region30: #{tpu_custom_call.1} parent=27 // pred_check_branch
          %160 = sbr.rel (%p158) target = $region32
        $region31: #{tpu_custom_call.1} parent=27 // pred_region
          %161 = dma.done %s154, 3072
        $region32: #{tpu_custom_call.1} parent=27 // pred_fallthru
          _
        %s162 = sand.u32 %s38, 1
        %s163 = scalar_lea.sflag [#allocation5], %s162
        %s164 = sand.u32 %s38, 1
        %s165 = smul.addr %s164, 192
        %s166 = scalar_lea.vmem [#allocation4], %s165
        %p167 = pneg %p51
        %p168 = pneg %p48
        %p169 = pneg %p72
        %p170 = pneg %p69
        %p171 = pneg %p100
        %p172 = pneg %p97
        %s173 = smul.u32 16, %s21
        %p174 = scmp.lt.s32.totalorder %s20, 1
        %s175 = scalar_select %p174, %s20, 1
        %p176 = scmp.lt.s32.totalorder %s173, 31
        %s177 = scalar_select %p176, %s173, 31
        %s178 = smul.addr %s175, 32
        %s179 = sadd.s32 %s177, %s178
        %s180 = smul.addr %s179, 8
        %s181 = scalar_lea.vmem %s2, %s180
        %s182 = smul.u32 16, %s21
        %s183 = smul.u32 16, %s21
        %p184 = scmp.lt.s32.totalorder %s20, 1
        %s185 = scalar_select %p184, %s20, 1
        %p186 = scmp.lt.s32.totalorder %s183, 31
        %s187 = scalar_select %p186, %s183, 31
        %s188 = smul.addr %s185, 32
        %s189 = sadd.s32 %s187, %s188
        %s190 = smul.addr %s189, 8
        %s191 = scalar_lea.vmem %s2, %s190
        %s192 = smul.u32 16, %s21
        %v194 = vld [vmem:[%s157] sm:$0xff]
        %v195 = vld [vmem:[%s157 + $0x8] sm:$0xf]
        %v196 = vld [vmem:[%s157 + $0xc] sm:$0xff]
        %v197 = vld [vmem:[%s157 + $0x14] sm:$0xf]
        %v198 = vld [vmem:[%s157 + $0x18] sm:$0xff]
        %v199 = vld [vmem:[%s157 + $0x20] sm:$0xf]
        %v200 = vld [vmem:[%s157 + $0x24] sm:$0xff]
        %v201 = vld [vmem:[%s157 + $0x2c] sm:$0xf]
        %v202 = vld [vmem:[%s157 + $0x30] sm:$0xff]
        %v203 = vld [vmem:[%s157 + $0x38] sm:$0xf]
        %v204 = vld [vmem:[%s157 + $0x3c] sm:$0xff]
        %v205 = vld [vmem:[%s157 + $0x44] sm:$0xf]
        %v206 = vld [vmem:[%s157 + $0x48] sm:$0xff]
        %v207 = vld [vmem:[%s157 + $0x50] sm:$0xf]
        %v208 = vld [vmem:[%s157 + $0x54] sm:$0xff]
        %v209 = vld [vmem:[%s157 + $0x5c] sm:$0xf]
        %v210 = vld [vmem:[%s157 + $0x60] sm:$0xff]
        %v211 = vld [vmem:[%s157 + $0x68] sm:$0xf]
        %v212 = vld [vmem:[%s157 + $0x6c] sm:$0xff]
        %v213 = vld [vmem:[%s157 + $0x74] sm:$0xf]
        %v214 = vld [vmem:[%s157 + $0x78] sm:$0xff]
        %v215 = vld [vmem:[%s157 + $0x80] sm:$0xf]
        %v216 = vld [vmem:[%s157 + $0x84] sm:$0xff]
        %v217 = vld [vmem:[%s157 + $0x8c] sm:$0xf]
        %v218 = vld [vmem:[%s157 + $0x90] sm:$0xff]
        %v219 = vld [vmem:[%s157 + $0x98] sm:$0xf]
        %v220 = vld [vmem:[%s157 + $0x9c] sm:$0xff]
        %v221 = vld [vmem:[%s157 + $0xa4] sm:$0xf]
        %v222 = vld [vmem:[%s157 + $0xa8] sm:$0xff]
        %v223 = vld [vmem:[%s157 + $0xb0] sm:$0xf]
        %v224 = vld [vmem:[%s157 + $0xb4] sm:$0xff]
        %v225 = vld [vmem:[%s157 + $0xbc] sm:$0xf]
        %v226 = vld [vmem:[%s1] sm:$0xff]
        %v227 = vld [vmem:[%s1 + $0x8] sm:$0xff]
        %v228 = vld [vmem:[%s1 + $0x10] sm:$0xff]
        %v229 = vld [vmem:[%s1 + $0x18] sm:$0xff]
        %v230 = vld [vmem:[%s1 + $0x20] sm:$0xff]
        %v231 = vld [vmem:[%s1 + $0x28] sm:$0xff]
        %v232 = vld [vmem:[%s1 + $0x30] sm:$0xff]
        %v233 = vld [vmem:[%s1 + $0x38] sm:$0xff]
        %v234 = vld [vmem:[%s1 + $0x40] sm:$0xff]
        %v235 = vld [vmem:[%s1 + $0x48] sm:$0xff]
        %v236 = vld [vmem:[%s1 + $0x50] sm:$0xff]
        %v237 = vld [vmem:[%s1 + $0x58] sm:$0xff]
        %v238 = vld [vmem:[%s1 + $0x60] sm:$0xff]
        %v239 = vld [vmem:[%s1 + $0x68] sm:$0xff]
        %v240 = vld [vmem:[%s1 + $0x70] sm:$0xff]
        %v241 = vld [vmem:[%s1 + $0x78] sm:$0xff]
        %v242 = vld [vmem:[%s1 + $0x80] sm:$0xff]
        %v243 = vld [vmem:[%s1 + $0x88] sm:$0xff]
        %v244 = vld [vmem:[%s1 + $0x90] sm:$0xff]
        %v245 = vld [vmem:[%s1 + $0x98] sm:$0xff]
        %v246 = vld [vmem:[%s1 + $0xa0] sm:$0xff]
        %v247 = vld [vmem:[%s1 + $0xa8] sm:$0xff]
        %v248 = vld [vmem:[%s1 + $0xb0] sm:$0xff]
        %v249 = vld [vmem:[%s1 + $0xb8] sm:$0xff]
        %v250 = vld [vmem:[%s1 + $0xc0] sm:$0xff]
        %v251 = vld [vmem:[%s1 + $0xc8] sm:$0xff]
        %v252 = vld [vmem:[%s1 + $0xd0] sm:$0xff]
        %v253 = vld [vmem:[%s1 + $0xd8] sm:$0xff]
        %v254 = vld [vmem:[%s1 + $0xe0] sm:$0xff]
        %v255 = vld [vmem:[%s1 + $0xe8] sm:$0xff]
        %v256 = vld [vmem:[%s1 + $0xf0] sm:$0xff]
        %v257 = vld [vmem:[%s1 + $0xf8] sm:$0xff]
        %v258 = vld [vmem:[%s1 + $0x100] sm:$0xff]
        %v259 = vld [vmem:[%s1 + $0x108] sm:$0xff]
        %v260 = vld [vmem:[%s1 + $0x110] sm:$0xff]
        %v261 = vld [vmem:[%s1 + $0x118] sm:$0xff]
        %v262 = vld [vmem:[%s1 + $0x120] sm:$0xff]
        %v263 = vld [vmem:[%s1 + $0x128] sm:$0xff]
        %v264 = vld [vmem:[%s1 + $0x130] sm:$0xff]
        %v265 = vld [vmem:[%s1 + $0x138] sm:$0xff]
        %v266 = vld [vmem:[%s1 + $0x140] sm:$0xff]
        %v267 = vld [vmem:[%s1 + $0x148] sm:$0xff]
        %v268 = vld [vmem:[%s1 + $0x150] sm:$0xff]
        %v269 = vld [vmem:[%s1 + $0x158] sm:$0xff]
        %v270 = vld [vmem:[%s1 + $0x160] sm:$0xff]
        %v271 = vld [vmem:[%s1 + $0x168] sm:$0xff]
        %v272 = vld [vmem:[%s1 + $0x170] sm:$0xff]
        %v273 = vld [vmem:[%s1 + $0x178] sm:$0xff]
        %v306 = vunpack.c.l.b16 %v194
        %v307 = vunpack.c.h.b16 %v194
        %v308 = vunpack.c.l.b16 %v195
        %v309 = vunpack.c.l.b16 %v196
        %v310 = vunpack.c.h.b16 %v196
        %v311 = vunpack.c.l.b16 %v197
        %v312 = vunpack.c.l.b16 %v198
        %v313 = vunpack.c.h.b16 %v198
        %v314 = vunpack.c.l.b16 %v199
        %v315 = vunpack.c.l.b16 %v200
        %v316 = vunpack.c.h.b16 %v200
        %v317 = vunpack.c.l.b16 %v201
        %v318 = vunpack.c.l.b16 %v202
        %v319 = vunpack.c.h.b16 %v202
        %v320 = vunpack.c.l.b16 %v203
        %v321 = vunpack.c.l.b16 %v204
        %v322 = vunpack.c.h.b16 %v204
        %v323 = vunpack.c.l.b16 %v205
        %v324 = vunpack.c.l.b16 %v206
        %v325 = vunpack.c.h.b16 %v206
        %v326 = vunpack.c.l.b16 %v207
        %v327 = vunpack.c.l.b16 %v208
        %v328 = vunpack.c.h.b16 %v208
        %v329 = vunpack.c.l.b16 %v209
        %v330 = vunpack.c.l.b16 %v210
        %v331 = vunpack.c.h.b16 %v210
        %v332 = vunpack.c.l.b16 %v211
        %v333 = vunpack.c.l.b16 %v212
        %v334 = vunpack.c.h.b16 %v212
        %v335 = vunpack.c.l.b16 %v213
        %v336 = vunpack.c.l.b16 %v214
        %v337 = vunpack.c.h.b16 %v214
        %v338 = vunpack.c.l.b16 %v215
        %v339 = vunpack.c.l.b16 %v216
        %v340 = vunpack.c.h.b16 %v216
        %v341 = vunpack.c.l.b16 %v217
        %v342 = vunpack.c.l.b16 %v218
        %v343 = vunpack.c.h.b16 %v218
        %v344 = vunpack.c.l.b16 %v219
        %v345 = vunpack.c.l.b16 %v220
        %v346 = vunpack.c.h.b16 %v220
        %v347 = vunpack.c.l.b16 %v221
        %v348 = vunpack.c.l.b16 %v222
        %v349 = vunpack.c.h.b16 %v222
        %v350 = vunpack.c.l.b16 %v223
        %v351 = vunpack.c.l.b16 %v224
        %v352 = vunpack.c.h.b16 %v224
        %v353 = vunpack.c.l.b16 %v225
        %v354 = vpack.c.b16 %v309, %v306
        %v355 = vpack.c.b16 %v310, %v307
        %v356 = vpack.c.b16 %v311, %v308
        %v357 = vpack.c.b16 %v315, %v312
        %v358 = vpack.c.b16 %v316, %v313
        %v359 = vpack.c.b16 %v317, %v314
        %v360 = vpack.c.b16 %v321, %v318
        %v361 = vpack.c.b16 %v322, %v319
        %v362 = vpack.c.b16 %v323, %v320
        %v363 = vpack.c.b16 %v327, %v324
        %v364 = vpack.c.b16 %v328, %v325
        %v365 = vpack.c.b16 %v329, %v326
        %v366 = vpack.c.b16 %v333, %v330
        %v367 = vpack.c.b16 %v334, %v331
        %v368 = vpack.c.b16 %v335, %v332
        %v369 = vpack.c.b16 %v339, %v336
        %v370 = vpack.c.b16 %v340, %v337
        %v371 = vpack.c.b16 %v341, %v338
        %v372 = vpack.c.b16 %v345, %v342
        %v373 = vpack.c.b16 %v346, %v343
        %v374 = vpack.c.b16 %v347, %v344
        %v375 = vpack.c.b16 %v351, %v348
        %v376 = vpack.c.b16 %v352, %v349
        %v377 = vpack.c.b16 %v353, %v350
        %v450 = vunpack.c.l.b16 %v226
        %v451 = vunpack.c.h.b16 %v226
        %v452 = vunpack.c.l.b16 %v227
        %v453 = vunpack.c.h.b16 %v227
        %v454 = vunpack.c.l.b16 %v228
        %v455 = vunpack.c.h.b16 %v228
        %v456 = vunpack.c.l.b16 %v229
        %v457 = vunpack.c.h.b16 %v229
        %v458 = vunpack.c.l.b16 %v230
        %v459 = vunpack.c.h.b16 %v230
        %v460 = vunpack.c.l.b16 %v231
        %v461 = vunpack.c.h.b16 %v231
        %v462 = vunpack.c.l.b16 %v232
        %v463 = vunpack.c.h.b16 %v232
        %v464 = vunpack.c.l.b16 %v233
        %v465 = vunpack.c.h.b16 %v233
        %v466 = vunpack.c.l.b16 %v234
        %v467 = vunpack.c.h.b16 %v234
        %v468 = vunpack.c.l.b16 %v235
        %v469 = vunpack.c.h.b16 %v235
        %v470 = vunpack.c.l.b16 %v236
        %v471 = vunpack.c.h.b16 %v236
        %v472 = vunpack.c.l.b16 %v237
        %v473 = vunpack.c.h.b16 %v237
        %v474 = vunpack.c.l.b16 %v238
        %v475 = vunpack.c.h.b16 %v238
        %v476 = vunpack.c.l.b16 %v239
        %v477 = vunpack.c.h.b16 %v239
        %v478 = vunpack.c.l.b16 %v240
        %v479 = vunpack.c.h.b16 %v240
        %v480 = vunpack.c.l.b16 %v241
        %v481 = vunpack.c.h.b16 %v241
        %v482 = vunpack.c.l.b16 %v242
        %v483 = vunpack.c.h.b16 %v242
        %v484 = vunpack.c.l.b16 %v243
        %v485 = vunpack.c.h.b16 %v243
        %v486 = vunpack.c.l.b16 %v244
        %v487 = vunpack.c.h.b16 %v244
        %v488 = vunpack.c.l.b16 %v245
        %v489 = vunpack.c.h.b16 %v245
        %v490 = vunpack.c.l.b16 %v246
        %v491 = vunpack.c.h.b16 %v246
        %v492 = vunpack.c.l.b16 %v247
        %v493 = vunpack.c.h.b16 %v247
        %v494 = vunpack.c.l.b16 %v248
        %v495 = vunpack.c.h.b16 %v248
        %v496 = vunpack.c.l.b16 %v249
        %v497 = vunpack.c.h.b16 %v249
        %v498 = vunpack.c.l.b16 %v250
        %v499 = vunpack.c.h.b16 %v250
        %v500 = vunpack.c.l.b16 %v251
        %v501 = vunpack.c.h.b16 %v251
        %v502 = vunpack.c.l.b16 %v252
        %v503 = vunpack.c.h.b16 %v252
        %v504 = vunpack.c.l.b16 %v253
        %v505 = vunpack.c.h.b16 %v253
        %v506 = vunpack.c.l.b16 %v254
        %v507 = vunpack.c.h.b16 %v254
        %v508 = vunpack.c.l.b16 %v255
        %v509 = vunpack.c.h.b16 %v255
        %v510 = vunpack.c.l.b16 %v256
        %v511 = vunpack.c.h.b16 %v256
        %v512 = vunpack.c.l.b16 %v257
        %v513 = vunpack.c.h.b16 %v257
        %v514 = vunpack.c.l.b16 %v258
        %v515 = vunpack.c.h.b16 %v258
        %v516 = vunpack.c.l.b16 %v259
        %v517 = vunpack.c.h.b16 %v259
        %v518 = vunpack.c.l.b16 %v260
        %v519 = vunpack.c.h.b16 %v260
        %v520 = vunpack.c.l.b16 %v261
        %v521 = vunpack.c.h.b16 %v261
        %v522 = vunpack.c.l.b16 %v262
        %v523 = vunpack.c.h.b16 %v262
        %v524 = vunpack.c.l.b16 %v263
        %v525 = vunpack.c.h.b16 %v263
        %v526 = vunpack.c.l.b16 %v264
        %v527 = vunpack.c.h.b16 %v264
        %v528 = vunpack.c.l.b16 %v265
        %v529 = vunpack.c.h.b16 %v265
        %v530 = vunpack.c.l.b16 %v266
        %v531 = vunpack.c.h.b16 %v266
        %v532 = vunpack.c.l.b16 %v267
        %v533 = vunpack.c.h.b16 %v267
        %v534 = vunpack.c.l.b16 %v268
        %v535 = vunpack.c.h.b16 %v268
        %v536 = vunpack.c.l.b16 %v269
        %v537 = vunpack.c.h.b16 %v269
        %v538 = vunpack.c.l.b16 %v270
        %v539 = vunpack.c.h.b16 %v270
        %v540 = vunpack.c.l.b16 %v271
        %v541 = vunpack.c.h.b16 %v271
        %v542 = vunpack.c.l.b16 %v272
        %v543 = vunpack.c.h.b16 %v272
        %v544 = vunpack.c.l.b16 %v273
        %v545 = vunpack.c.h.b16 %v273
        %v546 = vpack.c.b16 %v452, %v450
        %v547 = vpack.c.b16 %v453, %v451
        %v548 = vpack.c.b16 %v456, %v454
        %v549 = vpack.c.b16 %v457, %v455
        %v550 = vpack.c.b16 %v460, %v458
        %v551 = vpack.c.b16 %v461, %v459
        %v552 = vpack.c.b16 %v464, %v462
        %v553 = vpack.c.b16 %v465, %v463
        %v554 = vpack.c.b16 %v468, %v466
        %v555 = vpack.c.b16 %v469, %v467
        %v556 = vpack.c.b16 %v472, %v470
        %v557 = vpack.c.b16 %v473, %v471
        %v558 = vpack.c.b16 %v476, %v474
        %v559 = vpack.c.b16 %v477, %v475
        %v560 = vpack.c.b16 %v480, %v478
        %v561 = vpack.c.b16 %v481, %v479
        %v562 = vpack.c.b16 %v484, %v482
        %v563 = vpack.c.b16 %v485, %v483
        %v564 = vpack.c.b16 %v488, %v486
        %v565 = vpack.c.b16 %v489, %v487
        %v566 = vpack.c.b16 %v492, %v490
        %v567 = vpack.c.b16 %v493, %v491
        %v568 = vpack.c.b16 %v496, %v494
        %v569 = vpack.c.b16 %v497, %v495
        %v570 = vpack.c.b16 %v500, %v498
        %v571 = vpack.c.b16 %v501, %v499
        %v572 = vpack.c.b16 %v504, %v502
        %v573 = vpack.c.b16 %v505, %v503
        %v574 = vpack.c.b16 %v508, %v506
        %v575 = vpack.c.b16 %v509, %v507
        %v576 = vpack.c.b16 %v512, %v510
        %v577 = vpack.c.b16 %v513, %v511
        %v578 = vpack.c.b16 %v516, %v514
        %v579 = vpack.c.b16 %v517, %v515
        %v580 = vpack.c.b16 %v520, %v518
        %v581 = vpack.c.b16 %v521, %v519
        %v582 = vpack.c.b16 %v524, %v522
        %v583 = vpack.c.b16 %v525, %v523
        %v584 = vpack.c.b16 %v528, %v526
        %v585 = vpack.c.b16 %v529, %v527
        %v586 = vpack.c.b16 %v532, %v530
        %v587 = vpack.c.b16 %v533, %v531
        %v588 = vpack.c.b16 %v536, %v534
        %v589 = vpack.c.b16 %v537, %v535
        %v590 = vpack.c.b16 %v540, %v538
        %v591 = vpack.c.b16 %v541, %v539
        %v592 = vpack.c.b16 %v544, %v542
        %v593 = vpack.c.b16 %v545, %v543
        %642 = vmatprep.subr.bf16.mxu0 %v547
        %643 = vmatpush1.bf16.msra.mxu0 %v546
        %644 = vmatprep.subr.bf16.mxu0 %v549
        %645 = vmatpush1.bf16.msra.mxu0 %v548
        %646 = vmatprep.subr.bf16.mxu0 %v551
        %647 = vmatpush1.bf16.msra.mxu0 %v550
        %648 = vmatprep.subr.bf16.mxu0 %v553
        %649 = vmatpush1.bf16.msra.mxu0 %v552
        %650 = vmatprep.subr.bf16.mxu0 %v555
        %651 = vmatpush1.bf16.msra.mxu0 %v554
        %652 = vmatprep.subr.bf16.mxu0 %v557
        %653 = vmatpush1.bf16.msra.mxu0 %v556
        %654 = vmatprep.subr.bf16.mxu0 %v559
        %655 = vmatpush1.bf16.msra.mxu0 %v558
        %656 = vmatprep.subr.bf16.mxu0 %v561
        %657 = vmatpush1.bf16.msra.mxu0 %v560
        %658 = vmatprep.subr.bf16.mxu0 %v563
        %659 = vmatpush1.bf16.msra.mxu0 %v562
        %660 = vmatprep.subr.bf16.mxu0 %v565
        %661 = vmatpush1.bf16.msra.mxu0 %v564
        %662 = vmatprep.subr.bf16.mxu0 %v567
        %663 = vmatpush1.bf16.msra.mxu0 %v566
        %664 = vmatprep.subr.bf16.mxu0 %v569
        %665 = vmatpush1.bf16.msra.mxu0 %v568
        %666 = vmatprep.subr.bf16.mxu0 %v571
        %667 = vmatpush1.bf16.msra.mxu0 %v570
        %668 = vmatprep.subr.bf16.mxu0 %v573
        %669 = vmatpush1.bf16.msra.mxu0 %v572
        %670 = vmatprep.subr.bf16.mxu0 %v575
        %671 = vmatpush1.bf16.msra.mxu0 %v574
        %672 = vmatprep.subr.bf16.mxu0 %v577
        %673 = vmatpush1.bf16.msra.mxu0 %v576
        %674 = vmatprep.mubr.bf16.mxu0 %v355
        %675 = vmatmul.mubr.bf16.gmra.mrb[0].mxu0 %v354
        %v676 = vpop.f32.mrb[0].mxu0
        %v677 = vadd.f32 0.0, %v676
        %v678 = vpop.f32.mrb[0].mxu0
        %v679 = vadd.f32 0.0, %v678
        %v680 = vpop.f32.mrb[0].mxu0
        %v681 = vadd.f32 0.0, %v680
        %v682 = vpop.f32.mrb[0].mxu0
        %v683 = vadd.f32 0.0, %v682
        %684 = vmatprep.mubr.bf16.mxu0 %v358
        %685 = vmatmul.mubr.bf16.gmra.mrb[0].mxu0 %v357
        %v686 = vpop.f32.mrb[0].mxu0
        %v687 = vadd.f32 0.0, %v686
        %v688 = vpop.f32.mrb[0].mxu0
        %v689 = vadd.f32 0.0, %v688
        %v690 = vpop.f32.mrb[0].mxu0
        %v691 = vadd.f32 0.0, %v690
        %v692 = vpop.f32.mrb[0].mxu0
        %v693 = vadd.f32 0.0, %v692
        %694 = vmatprep.mubr.bf16.mxu0 %v361
        %695 = vmatmul.mubr.bf16.gmra.mrb[0].mxu0 %v360
        %v696 = vpop.f32.mrb[0].mxu0
        %v697 = vadd.f32 0.0, %v696
        %v698 = vpop.f32.mrb[0].mxu0
        %v699 = vadd.f32 0.0, %v698
        %v700 = vpop.f32.mrb[0].mxu0
        %v701 = vadd.f32 0.0, %v700
        %v702 = vpop.f32.mrb[0].mxu0
        %v703 = vadd.f32 0.0, %v702
        %704 = vmatprep.mubr.bf16.mxu0 %v364
        %705 = vmatmul.mubr.bf16.gmra.mrb[0].mxu0 %v363
        %v706 = vpop.f32.mrb[0].mxu0
        %v707 = vadd.f32 0.0, %v706
        %v708 = vpop.f32.mrb[0].mxu0
        %v709 = vadd.f32 0.0, %v708
        %v710 = vpop.f32.mrb[0].mxu0
        %v711 = vadd.f32 0.0, %v710
        %v712 = vpop.f32.mrb[0].mxu0
        %v713 = vadd.f32 0.0, %v712
        %714 = vmatprep.mubr.bf16.mxu0 %v367
        %715 = vmatmul.mubr.bf16.gmra.mrb[0].mxu0 %v366
        %v716 = vpop.f32.mrb[0].mxu0
        %v717 = vadd.f32 0.0, %v716
        %v718 = vpop.f32.mrb[0].mxu0
        %v719 = vadd.f32 0.0, %v718
        %v720 = vpop.f32.mrb[0].mxu0
        %v721 = vadd.f32 0.0, %v720
        %v722 = vpop.f32.mrb[0].mxu0
        %v723 = vadd.f32 0.0, %v722
        %724 = vmatprep.mubr.bf16.mxu0 %v370
        %725 = vmatmul.mubr.bf16.gmra.mrb[0].mxu0 %v369
        %v726 = vpop.f32.mrb[0].mxu0
        %v727 = vadd.f32 0.0, %v726
        %v728 = vpop.f32.mrb[0].mxu0
        %v729 = vadd.f32 0.0, %v728
        %v730 = vpop.f32.mrb[0].mxu0
        %v731 = vadd.f32 0.0, %v730
        %v732 = vpop.f32.mrb[0].mxu0
        %v733 = vadd.f32 0.0, %v732
        %734 = vmatprep.mubr.bf16.mxu0 %v373
        %735 = vmatmul.mubr.bf16.gmra.mrb[0].mxu0 %v372
        %v736 = vpop.f32.mrb[0].mxu0
        %v737 = vadd.f32 0.0, %v736
        %v738 = vpop.f32.mrb[0].mxu0
        %v739 = vadd.f32 0.0, %v738
        %v740 = vpop.f32.mrb[0].mxu0
        %v741 = vadd.f32 0.0, %v740
        %v742 = vpop.f32.mrb[0].mxu0
        %v743 = vadd.f32 0.0, %v742
        %744 = vmatprep.mubr.bf16.mxu0 %v376
        %745 = vmatmul.mubr.bf16.gmra.mrb[0].mxu0 %v375
        %v746 = vpop.f32.mrb[0].mxu0
        %v747 = vadd.f32 0.0, %v746
        %v748 = vpop.f32.mrb[0].mxu0
        %v749 = vadd.f32 0.0, %v748
        %v750 = vpop.f32.mrb[0].mxu0
        %v751 = vadd.f32 0.0, %v750
        %v752 = vpop.f32.mrb[0].mxu0
        %v753 = vadd.f32 0.0, %v752
        %754 = vdwg.mxu0
        %755 = vmatprep.subr.bf16.mxu0 %v579
        %756 = vmatpush1.bf16.msra.mxu0 %v578
        %757 = vmatprep.subr.bf16.mxu0 %v581
        %758 = vmatpush1.bf16.msra.mxu0 %v580
        %759 = vmatprep.subr.bf16.mxu0 %v583
        %760 = vmatpush1.bf16.msra.mxu0 %v582
        %761 = vmatprep.subr.bf16.mxu0 %v585
        %762 = vmatpush1.bf16.msra.mxu0 %v584
        %763 = vmatprep.subr.bf16.mxu0 %v587
        %764 = vmatpush1.bf16.msra.mxu0 %v586
        %765 = vmatprep.subr.bf16.mxu0 %v589
        %766 = vmatpush1.bf16.msra.mxu0 %v588
        %767 = vmatprep.subr.bf16.mxu0 %v591
        %768 = vmatpush1.bf16.msra.mxu0 %v590
        %769 = vmatprep.subr.bf16.mxu0 %v593
        %770 = vmatpush1.bf16.msra.mxu0 %v592
        %771 = vmatprep.subr.bf16.mxu0 0
        %772 = vmatpush1.bf16.msra.mxu0 0
        %773 = vmatprep.subr.bf16.mxu0 0
        %774 = vmatpush1.bf16.msra.mxu0 0
        %775 = vmatprep.subr.bf16.mxu0 0
        %776 = vmatpush1.bf16.msra.mxu0 0
        %777 = vmatprep.subr.bf16.mxu0 0
        %778 = vmatpush1.bf16.msra.mxu0 0
        %779 = vmatprep.subr.bf16.mxu0 0
        %780 = vmatpush1.bf16.msra.mxu0 0
        %781 = vmatprep.subr.bf16.mxu0 0
        %782 = vmatpush1.bf16.msra.mxu0 0
        %783 = vmatprep.subr.bf16.mxu0 0
        %784 = vmatpush1.bf16.msra.mxu0 0
        %785 = vmatprep.subr.bf16.mxu0 0
        %786 = vmatpush1.bf16.msra.mxu0 0
        %787 = vmatprep.mubr.bf16.mxu0 0
        %788 = vmatmul.mubr.bf16.gmra.mrb[0].mxu0 %v356
        %v789 = vpop.f32.mrb[0].mxu0
        %v790 = vadd.f32 %v677, %v789
        %v791 = vpop.f32.mrb[0].mxu0
        %v792 = vadd.f32 %v679, %v791
        %v793 = vpop.f32.mrb[0].mxu0
        %v794 = vadd.f32 %v681, %v793
        %v795 = vpop.f32.mrb[0].mxu0
        %v796 = vadd.f32 %v683, %v795
        %797 = vmatprep.mubr.bf16.mxu0 0
        %798 = vmatmul.mubr.bf16.gmra.mrb[0].mxu0 %v359
        %v799 = vpop.f32.mrb[0].mxu0
        %v800 = vadd.f32 %v687, %v799
        %v801 = vpop.f32.mrb[0].mxu0
        %v802 = vadd.f32 %v689, %v801
        %v803 = vpop.f32.mrb[0].mxu0
        %v804 = vadd.f32 %v691, %v803
        %v805 = vpop.f32.mrb[0].mxu0
        %v806 = vadd.f32 %v693, %v805
        %807 = vmatprep.mubr.bf16.mxu0 0
        %808 = vmatmul.mubr.bf16.gmra.mrb[0].mxu0 %v362
        %v809 = vpop.f32.mrb[0].mxu0
        %v810 = vadd.f32 %v697, %v809
        %v811 = vpop.f32.mrb[0].mxu0
        %v812 = vadd.f32 %v699, %v811
        %v813 = vpop.f32.mrb[0].mxu0
        %v814 = vadd.f32 %v701, %v813
        %v815 = vpop.f32.mrb[0].mxu0
        %v816 = vadd.f32 %v703, %v815
        %817 = vmatprep.mubr.bf16.mxu0 0
        %818 = vmatmul.mubr.bf16.gmra.mrb[0].mxu0 %v365
        %v819 = vpop.f32.mrb[0].mxu0
        %v820 = vadd.f32 %v707, %v819
        %v821 = vpop.f32.mrb[0].mxu0
        %v822 = vadd.f32 %v709, %v821
        %v823 = vpop.f32.mrb[0].mxu0
        %v824 = vadd.f32 %v711, %v823
        %v825 = vpop.f32.mrb[0].mxu0
        %v826 = vadd.f32 %v713, %v825
        %827 = vmatprep.mubr.bf16.mxu0 0
        %828 = vmatmul.mubr.bf16.gmra.mrb[0].mxu0 %v368
        %v829 = vpop.f32.mrb[0].mxu0
        %v830 = vadd.f32 %v717, %v829
        %v831 = vpop.f32.mrb[0].mxu0
        %v832 = vadd.f32 %v719, %v831
        %v833 = vpop.f32.mrb[0].mxu0
        %v834 = vadd.f32 %v721, %v833
        %v835 = vpop.f32.mrb[0].mxu0
        %v836 = vadd.f32 %v723, %v835
        %837 = vmatprep.mubr.bf16.mxu0 0
        %838 = vmatmul.mubr.bf16.gmra.mrb[0].mxu0 %v371
        %v839 = vpop.f32.mrb[0].mxu0
        %v840 = vadd.f32 %v727, %v839
        %v841 = vpop.f32.mrb[0].mxu0
        %v842 = vadd.f32 %v729, %v841
        %v843 = vpop.f32.mrb[0].mxu0
        %v844 = vadd.f32 %v731, %v843
        %v845 = vpop.f32.mrb[0].mxu0
        %v846 = vadd.f32 %v733, %v845
        %847 = vmatprep.mubr.bf16.mxu0 0
        %848 = vmatmul.mubr.bf16.gmra.mrb[0].mxu0 %v374
        %v849 = vpop.f32.mrb[0].mxu0
        %v850 = vadd.f32 %v737, %v849
        %v851 = vpop.f32.mrb[0].mxu0
        %v852 = vadd.f32 %v739, %v851
        %v853 = vpop.f32.mrb[0].mxu0
        %v854 = vadd.f32 %v741, %v853
        %v855 = vpop.f32.mrb[0].mxu0
        %v856 = vadd.f32 %v743, %v855
        %857 = vmatprep.mubr.bf16.mxu0 0
        %858 = vmatmul.mubr.bf16.gmra.mrb[0].mxu0 %v377
        %v859 = vpop.f32.mrb[0].mxu0
        %v860 = vadd.f32 %v747, %v859
        %v861 = vpop.f32.mrb[0].mxu0
        %v862 = vadd.f32 %v749, %v861
        %v863 = vpop.f32.mrb[0].mxu0
        %v864 = vadd.f32 %v751, %v863
        %v865 = vpop.f32.mrb[0].mxu0
        %v866 = vadd.f32 %v753, %v865
        %867 = vdwg.mxu0
        %v868 = vpack.c.bf16 %v794, %v790
        %v869 = vpack.c.bf16 %v804, %v800
        %v870 = vpack.c.bf16 %v814, %v810
        %v871 = vpack.c.bf16 %v824, %v820
        %v872 = vpack.c.bf16 %v834, %v830
        %v873 = vpack.c.bf16 %v844, %v840
        %v874 = vpack.c.bf16 %v854, %v850
        %v875 = vpack.c.bf16 %v864, %v860
        %s876 = smul.u32 %s21, 128
        %885 = vrot.lane.b32.xlu0 %v868, 64
        %v886 = vpop.permute.xlu0 %885
        %887 = vrot.lane.b32.xlu0 %v869, 64
        %v888 = vpop.permute.xlu0 %887
        %889 = vrot.lane.b32.xlu0 %v870, 64
        %v890 = vpop.permute.xlu0 %889
        %891 = vrot.lane.b32.xlu0 %v871, 64
        %v892 = vpop.permute.xlu0 %891
        %893 = vrot.lane.b32.xlu0 %v872, 64
        %v894 = vpop.permute.xlu0 %893
        %895 = vrot.lane.b32.xlu0 %v873, 64
        %v896 = vpop.permute.xlu0 %895
        %897 = vrot.lane.b32.xlu0 %v874, 64
        %v898 = vpop.permute.xlu0 %897
        %899 = vrot.lane.b32.xlu0 %v875, 64
        %v900 = vpop.permute.xlu0 %899
        %s909 = sshra.s32 %s876, 4
        %s910 = sand.u32 %s876, 15
        %s911 = smul.addr %s909, 8
        %s912 = scalar_lea.vmem [#allocation2], %s911
        %vm913 = vcmask 523264
        %914 = vst.msk [vmem:[%s912] sm:$0xff] %vm913, %v886
        %915 = vst.msk [vmem:[%s912 + $0x8] sm:$0xff] %vm913, %v888
        %916 = vst.msk [vmem:[%s912 + $0x10] sm:$0xff] %vm913, %v890
        %917 = vst.msk [vmem:[%s912 + $0x18] sm:$0xff] %vm913, %v892
        %918 = vst.msk [vmem:[%s912 + $0x20] sm:$0xff] %vm913, %v894
        %919 = vst.msk [vmem:[%s912 + $0x28] sm:$0xff] %vm913, %v896
        %920 = vst.msk [vmem:[%s912 + $0x30] sm:$0xff] %vm913, %v898
        %921 = vst.msk [vmem:[%s912 + $0x38] sm:$0xff] %vm913, %v900
        %v922 = vpack.c.bf16 %v796, %v792
        %v923 = vpack.c.bf16 %v806, %v802
        %v924 = vpack.c.bf16 %v816, %v812
        %v925 = vpack.c.bf16 %v826, %v822
        %v926 = vpack.c.bf16 %v836, %v832
        %v927 = vpack.c.bf16 %v846, %v842
        %v928 = vpack.c.bf16 %v856, %v852
        %v929 = vpack.c.bf16 %v866, %v862
        %s930 = smul.addr %s909, 8
        %s931 = scalar_lea.vmem [#allocation3], %s930
        %932 = vst.msk [vmem:[%s931] sm:$0xff] %vm913, %v922
        %933 = vst.msk [vmem:[%s931 + $0x8] sm:$0xff] %vm913, %v923
        %934 = vst.msk [vmem:[%s931 + $0x10] sm:$0xff] %vm913, %v924
        %935 = vst.msk [vmem:[%s931 + $0x18] sm:$0xff] %vm913, %v925
        %936 = vst.msk [vmem:[%s931 + $0x20] sm:$0xff] %vm913, %v926
        %937 = vst.msk [vmem:[%s931 + $0x28] sm:$0xff] %vm913, %v927
        %938 = vst.msk [vmem:[%s931 + $0x30] sm:$0xff] %vm913, %v928
        %939 = vst.msk [vmem:[%s931 + $0x38] sm:$0xff] %vm913, %v929
        %v940 = vlaneseq
        %v941 = vshrl.u32 %v940, 7
        %v942 = vadd.s32 %v941, 8
        %v943 = vadd.s32 %v941, 16
        %v944 = vadd.s32 %v941, 24
        %v945 = vadd.s32 %v941, 32
        %v946 = vadd.s32 %v941, 40
        %v947 = vadd.s32 %v941, 48
        %v948 = vadd.s32 %v941, 56
        %v949 = vadd.s32 %v941, 64
        %v950 = vadd.s32 %v941, 72
        %v951 = vadd.s32 %v941, 80
        %v952 = vadd.s32 %v941, 88
        %v953 = vadd.s32 %v941, 96
        %v954 = vadd.s32 %v941, 104
        %v955 = vadd.s32 %v941, 112
        %v956 = vadd.s32 %v941, 120
        %v957 = vstv %s876
        %v958 = vadd.s32 %v957, %v941
        %v959 = vadd.s32 %v957, %v942
        %v960 = vadd.s32 %v957, %v943
        %v961 = vadd.s32 %v957, %v944
        %v962 = vadd.s32 %v957, %v945
        %v963 = vadd.s32 %v957, %v946
        %v964 = vadd.s32 %v957, %v947
        %v965 = vadd.s32 %v957, %v948
        %v966 = vadd.s32 %v957, %v949
        %v967 = vadd.s32 %v957, %v950
        %v968 = vadd.s32 %v957, %v951
        %v969 = vadd.s32 %v957, %v952
        %v970 = vadd.s32 %v957, %v953
        %v971 = vadd.s32 %v957, %v954
        %v972 = vadd.s32 %v957, %v955
        %v973 = vadd.s32 %v957, %v956
        %s974 = sadd.s32 %s21, 1
        // While loop
        $region33: #{tpu_custom_call.1} parent=27 // loop_pre_header
          _
        $region34: #{tpu_custom_call.1} parent=27 // loop_header
          %s976 = sphi 0, %s978
          %p977 = scmp.ge.s32.totalorder %s976, %s974
          %v981 = vphi -inf, %v1265
          %v982 = vphi -inf, %v1266
          %v983 = vphi -inf, %v1267
          %v984 = vphi -inf, %v1268
          %v985 = vphi -inf, %v1269
          %v986 = vphi -inf, %v1270
          %v987 = vphi -inf, %v1271
          %v988 = vphi -inf, %v1272
          %v989 = vphi -inf, %v1273
          %v990 = vphi -inf, %v1274
          %v991 = vphi -inf, %v1275
          %v992 = vphi -inf, %v1276
          %v993 = vphi -inf, %v1277
          %v994 = vphi -inf, %v1278
          %v995 = vphi -inf, %v1279
          %v996 = vphi -inf, %v1280
          %v997 = vphi 0.0, %v1425
          %v998 = vphi 0.0, %v1426
          %v999 = vphi 0.0, %v1427
          %v1000 = vphi 0.0, %v1428
          %v1001 = vphi 0.0, %v1429
          %v1002 = vphi 0.0, %v1430
          %v1003 = vphi 0.0, %v1431
          %v1004 = vphi 0.0, %v1432
          %v1005 = vphi 0.0, %v1433
          %v1006 = vphi 0.0, %v1434
          %v1007 = vphi 0.0, %v1435
          %v1008 = vphi 0.0, %v1436
          %v1009 = vphi 0.0, %v1437
          %v1010 = vphi 0.0, %v1438
          %v1011 = vphi 0.0, %v1439
          %v1012 = vphi 0.0, %v1440
          %v1013 = vphi 0.0, %v1562
          %v1014 = vphi 0.0, %v1563
          %v1015 = vphi 0.0, %v1564
          %v1016 = vphi 0.0, %v1565
          %v1017 = vphi 0.0, %v1566
          %v1018 = vphi 0.0, %v1567
          %v1019 = vphi 0.0, %v1568
          %v1020 = vphi 0.0, %v1569
          %v1021 = vphi 0.0, %v1570
          %v1022 = vphi 0.0, %v1571
          %v1023 = vphi 0.0, %v1572
          %v1024 = vphi 0.0, %v1573
          %v1025 = vphi 0.0, %v1574
          %v1026 = vphi 0.0, %v1575
          %v1027 = vphi 0.0, %v1576
          %v1028 = vphi 0.0, %v1577
        $region35: #{tpu_custom_call.1} parent=27 // loop_header_branch
          %980 = sbr.rel (%p977) target = $region39
        $region36: #{tpu_custom_call.1} parent=27 // loop_body
          %s1029 = smul.u32 %s976, 128
          %s1030 = sshra.s32 %s1029, 4
          %s1031 = sand.u32 %s1029, 15
          %s1032 = smul.addr %s1030, 8
          %s1033 = scalar_lea.vmem [#allocation2], %s1032
          %v1034 = vld [vmem:[%s1033] sm:$0xff]
          %v1035 = vld [vmem:[%s1033 + $0x8] sm:$0xff]
          %v1036 = vld [vmem:[%s1033 + $0x10] sm:$0xff]
          %v1037 = vld [vmem:[%s1033 + $0x18] sm:$0xff]
          %v1038 = vld [vmem:[%s1033 + $0x20] sm:$0xff]
          %v1039 = vld [vmem:[%s1033 + $0x28] sm:$0xff]
          %v1040 = vld [vmem:[%s1033 + $0x30] sm:$0xff]
          %v1041 = vld [vmem:[%s1033 + $0x38] sm:$0xff]
          %s1042 = smul.addr %s1030, 8
          %s1043 = scalar_lea.vmem [#allocation3], %s1042
          %v1044 = vld [vmem:[%s1043] sm:$0xff]
          %v1045 = vld [vmem:[%s1043 + $0x8] sm:$0xff]
          %v1046 = vld [vmem:[%s1043 + $0x10] sm:$0xff]
          %v1047 = vld [vmem:[%s1043 + $0x18] sm:$0xff]
          %v1048 = vld [vmem:[%s1043 + $0x20] sm:$0xff]
          %v1049 = vld [vmem:[%s1043 + $0x28] sm:$0xff]
          %v1050 = vld [vmem:[%s1043 + $0x30] sm:$0xff]
          %v1051 = vld [vmem:[%s1043 + $0x38] sm:$0xff]
          %v1053 = vsel %vm913, %v868, 0
          %v1056 = vsel %vm913, %v869, 0
          %v1059 = vsel %vm913, %v870, 0
          %v1062 = vsel %vm913, %v871, 0
          %v1065 = vsel %vm913, %v872, 0
          %v1068 = vsel %vm913, %v873, 0
          %v1071 = vsel %vm913, %v874, 0
          %v1074 = vsel %vm913, %v875, 0
          %v1077 = vsel %vm913, %v1034, 0
          %v1080 = vsel %vm913, %v1035, 0
          %v1083 = vsel %vm913, %v1036, 0
          %v1086 = vsel %vm913, %v1037, 0
          %v1089 = vsel %vm913, %v1038, 0
          %v1092 = vsel %vm913, %v1039, 0
          %v1095 = vsel %vm913, %v1040, 0
          %v1098 = vsel %vm913, %v1041, 0
          %1100 = vmatprep.subr.bf16.mxu0 0
          %1101 = vmatpush1.bf16.xpose.msra.mxu0 %v1077
          %1102 = vmatprep.subr.bf16.mxu0 0
          %1103 = vmatpush1.bf16.xpose.msra.mxu0 %v1080
          %1104 = vmatprep.subr.bf16.mxu0 0
          %1105 = vmatpush1.bf16.xpose.msra.mxu0 %v1083
          %1106 = vmatprep.subr.bf16.mxu0 0
          %1107 = vmatpush1.bf16.xpose.msra.mxu0 %v1086
          %1108 = vmatprep.subr.bf16.mxu0 0
          %1109 = vmatpush1.bf16.xpose.msra.mxu0 %v1089
          %1110 = vmatprep.subr.bf16.mxu0 0
          %1111 = vmatpush1.bf16.xpose.msra.mxu0 %v1092
          %1112 = vmatprep.subr.bf16.mxu0 0
          %1113 = vmatpush1.bf16.xpose.msra.mxu0 %v1095
          %1114 = vmatprep.subr.bf16.mxu0 0
          %1115 = vmatpush1.bf16.xpose.msra.mxu0 %v1098
          %1116 = vmatprep.subr.bf16.mxu0 0
          %1117 = vmatpush1.bf16.xpose.msra.mxu0 0
          %1118 = vmatprep.subr.bf16.mxu0 0
          %1119 = vmatpush1.bf16.xpose.msra.mxu0 0
          %1120 = vmatprep.subr.bf16.mxu0 0
          %1121 = vmatpush1.bf16.xpose.msra.mxu0 0
          %1122 = vmatprep.subr.bf16.mxu0 0
          %1123 = vmatpush1.bf16.xpose.msra.mxu0 0
          %1124 = vmatprep.subr.bf16.mxu0 0
          %1125 = vmatpush1.bf16.xpose.msra.mxu0 0
          %1126 = vmatprep.subr.bf16.mxu0 0
          %1127 = vmatpush1.bf16.xpose.msra.mxu0 0
          %1128 = vmatprep.subr.bf16.mxu0 0
          %1129 = vmatpush1.bf16.xpose.msra.mxu0 0
          %1130 = vmatprep.subr.bf16.mxu0 0
          %1131 = vmatpush1.bf16.xpose.msra.mxu0 0
          %1132 = vmatprep.mubr.bf16.mxu0 0
          %1133 = vmatmul.mubr.bf16.gmra.mrb[0].mxu0 %v1053
          %v1134 = vpop.f32.mrb[0].mxu0
          %v1135 = vadd.f32 0.0, %v1134
          %v1136 = vpop.f32.mrb[0].mxu0
          %v1137 = vpop.f32.mrb[0].mxu0
          %v1138 = vadd.f32 0.0, %v1137
          %v1139 = vpop.f32.mrb[0].mxu0
          %1140 = vmatprep.mubr.bf16.mxu0 0
          %1141 = vmatmul.mubr.bf16.gmra.mrb[0].mxu0 %v1056
          %v1142 = vpop.f32.mrb[0].mxu0
          %v1143 = vadd.f32 0.0, %v1142
          %v1144 = vpop.f32.mrb[0].mxu0
          %v1145 = vpop.f32.mrb[0].mxu0
          %v1146 = vadd.f32 0.0, %v1145
          %v1147 = vpop.f32.mrb[0].mxu0
          %1148 = vmatprep.mubr.bf16.mxu0 0
          %1149 = vmatmul.mubr.bf16.gmra.mrb[0].mxu0 %v1059
          %v1150 = vpop.f32.mrb[0].mxu0
          %v1151 = vadd.f32 0.0, %v1150
          %v1152 = vpop.f32.mrb[0].mxu0
          %v1153 = vpop.f32.mrb[0].mxu0
          %v1154 = vadd.f32 0.0, %v1153
          %v1155 = vpop.f32.mrb[0].mxu0
          %1156 = vmatprep.mubr.bf16.mxu0 0
          %1157 = vmatmul.mubr.bf16.gmra.mrb[0].mxu0 %v1062
          %v1158 = vpop.f32.mrb[0].mxu0
          %v1159 = vadd.f32 0.0, %v1158
          %v1160 = vpop.f32.mrb[0].mxu0
          %v1161 = vpop.f32.mrb[0].mxu0
          %v1162 = vadd.f32 0.0, %v1161
          %v1163 = vpop.f32.mrb[0].mxu0
          %1164 = vmatprep.mubr.bf16.mxu0 0
          %1165 = vmatmul.mubr.bf16.gmra.mrb[0].mxu0 %v1065
          %v1166 = vpop.f32.mrb[0].mxu0
          %v1167 = vadd.f32 0.0, %v1166
          %v1168 = vpop.f32.mrb[0].mxu0
          %v1169 = vpop.f32.mrb[0].mxu0
          %v1170 = vadd.f32 0.0, %v1169
          %v1171 = vpop.f32.mrb[0].mxu0
          %1172 = vmatprep.mubr.bf16.mxu0 0
          %1173 = vmatmul.mubr.bf16.gmra.mrb[0].mxu0 %v1068
          %v1174 = vpop.f32.mrb[0].mxu0
          %v1175 = vadd.f32 0.0, %v1174
          %v1176 = vpop.f32.mrb[0].mxu0
          %v1177 = vpop.f32.mrb[0].mxu0
          %v1178 = vadd.f32 0.0, %v1177
          %v1179 = vpop.f32.mrb[0].mxu0
          %1180 = vmatprep.mubr.bf16.mxu0 0
          %1181 = vmatmul.mubr.bf16.gmra.mrb[0].mxu0 %v1071
          %v1182 = vpop.f32.mrb[0].mxu0
          %v1183 = vadd.f32 0.0, %v1182
          %v1184 = vpop.f32.mrb[0].mxu0
          %v1185 = vpop.f32.mrb[0].mxu0
          %v1186 = vadd.f32 0.0, %v1185
          %v1187 = vpop.f32.mrb[0].mxu0
          %1188 = vmatprep.mubr.bf16.mxu0 0
          %1189 = vmatmul.mubr.bf16.gmra.mrb[0].mxu0 %v1074
          %v1190 = vpop.f32.mrb[0].mxu0
          %v1191 = vadd.f32 0.0, %v1190
          %v1192 = vpop.f32.mrb[0].mxu0
          %v1193 = vpop.f32.mrb[0].mxu0
          %v1194 = vadd.f32 0.0, %v1193
          %v1195 = vpop.f32.mrb[0].mxu0
          %1196 = vdwg.mxu0
          %v1197 = vlaneseq
          %v1198 = vand.u32 %v1197, 127
          %v1199 = vstv %s1029
          %v1200 = vadd.s32 %v1199, %v1198
          %vm1201 = vcmp.le.s32.totalorder %v1200, %v958
          %vm1202 = vcmp.le.s32.totalorder %v1200, %v959
          %vm1203 = vcmp.le.s32.totalorder %v1200, %v960
          %vm1204 = vcmp.le.s32.totalorder %v1200, %v961
          %vm1205 = vcmp.le.s32.totalorder %v1200, %v962
          %vm1206 = vcmp.le.s32.totalorder %v1200, %v963
          %vm1207 = vcmp.le.s32.totalorder %v1200, %v964
          %vm1208 = vcmp.le.s32.totalorder %v1200, %v965
          %vm1209 = vcmp.le.s32.totalorder %v1200, %v966
          %vm1210 = vcmp.le.s32.totalorder %v1200, %v967
          %vm1211 = vcmp.le.s32.totalorder %v1200, %v968
          %vm1212 = vcmp.le.s32.totalorder %v1200, %v969
          %vm1213 = vcmp.le.s32.totalorder %v1200, %v970
          %vm1214 = vcmp.le.s32.totalorder %v1200, %v971
          %vm1215 = vcmp.le.s32.totalorder %v1200, %v972
          %vm1216 = vcmp.le.s32.totalorder %v1200, %v973
          %v1217 = vsel %vm1201, %v1135, -1e+30
          %v1218 = vsel %vm1202, %v1138, -1e+30
          %v1219 = vsel %vm1203, %v1143, -1e+30
          %v1220 = vsel %vm1204, %v1146, -1e+30
          %v1221 = vsel %vm1205, %v1151, -1e+30
          %v1222 = vsel %vm1206, %v1154, -1e+30
          %v1223 = vsel %vm1207, %v1159, -1e+30
          %v1224 = vsel %vm1208, %v1162, -1e+30
          %v1225 = vsel %vm1209, %v1167, -1e+30
          %v1226 = vsel %vm1210, %v1170, -1e+30
          %v1227 = vsel %vm1211, %v1175, -1e+30
          %v1228 = vsel %vm1212, %v1178, -1e+30
          %v1229 = vsel %vm1213, %v1183, -1e+30
          %v1230 = vsel %vm1214, %v1186, -1e+30
          %v1231 = vsel %vm1215, %v1191, -1e+30
          %v1232 = vsel %vm1216, %v1194, -1e+30
          %1233 = vmax.xlane.f32.xlu0 %v1217
          %v1234 = vpop.xlane.xlu0 %1233
          %1235 = vmax.xlane.f32.xlu0 %v1218
          %v1236 = vpop.xlane.xlu0 %1235
          %1237 = vmax.xlane.f32.xlu0 %v1219
          %v1238 = vpop.xlane.xlu0 %1237
          %1239 = vmax.xlane.f32.xlu0 %v1220
          %v1240 = vpop.xlane.xlu0 %1239
          %1241 = vmax.xlane.f32.xlu0 %v1221
          %v1242 = vpop.xlane.xlu0 %1241
          %1243 = vmax.xlane.f32.xlu0 %v1222
          %v1244 = vpop.xlane.xlu0 %1243
          %1245 = vmax.xlane.f32.xlu0 %v1223
          %v1246 = vpop.xlane.xlu0 %1245
          %1247 = vmax.xlane.f32.xlu0 %v1224
          %v1248 = vpop.xlane.xlu0 %1247
          %1249 = vmax.xlane.f32.xlu0 %v1225
          %v1250 = vpop.xlane.xlu0 %1249
          %1251 = vmax.xlane.f32.xlu0 %v1226
          %v1252 = vpop.xlane.xlu0 %1251
          %1253 = vmax.xlane.f32.xlu0 %v1227
          %v1254 = vpop.xlane.xlu0 %1253
          %1255 = vmax.xlane.f32.xlu0 %v1228
          %v1256 = vpop.xlane.xlu0 %1255
          %1257 = vmax.xlane.f32.xlu0 %v1229
          %v1258 = vpop.xlane.xlu0 %1257
          %1259 = vmax.xlane.f32.xlu0 %v1230
          %v1260 = vpop.xlane.xlu0 %1259
          %1261 = vmax.xlane.f32.xlu0 %v1231
          %v1262 = vpop.xlane.xlu0 %1261
          %1263 = vmax.xlane.f32.xlu0 %v1232
          %v1264 = vpop.xlane.xlu0 %1263
          %v1265 = vmax.f32 %v981, %v1234
          %v1266 = vmax.f32 %v982, %v1236
          %v1267 = vmax.f32 %v983, %v1238
          %v1268 = vmax.f32 %v984, %v1240
          %v1269 = vmax.f32 %v985, %v1242
          %v1270 = vmax.f32 %v986, %v1244
          %v1271 = vmax.f32 %v987, %v1246
          %v1272 = vmax.f32 %v988, %v1248
          %v1273 = vmax.f32 %v989, %v1250
          %v1274 = vmax.f32 %v990, %v1252
          %v1275 = vmax.f32 %v991, %v1254
          %v1276 = vmax.f32 %v992, %v1256
          %v1277 = vmax.f32 %v993, %v1258
          %v1278 = vmax.f32 %v994, %v1260
          %v1279 = vmax.f32 %v995, %v1262
          %v1280 = vmax.f32 %v996, %v1264
          %v1281 = vsub.f32 %v981, %v1265
          %v1282 = vsub.f32 %v982, %v1266
          %v1283 = vsub.f32 %v983, %v1267
          %v1284 = vsub.f32 %v984, %v1268
          %v1285 = vsub.f32 %v985, %v1269
          %v1286 = vsub.f32 %v986, %v1270
          %v1287 = vsub.f32 %v987, %v1271
          %v1288 = vsub.f32 %v988, %v1272
          %v1289 = vsub.f32 %v989, %v1273
          %v1290 = vsub.f32 %v990, %v1274
          %v1291 = vsub.f32 %v991, %v1275
          %v1292 = vsub.f32 %v992, %v1276
          %v1293 = vsub.f32 %v993, %v1277
          %v1294 = vsub.f32 %v994, %v1278
          %v1295 = vsub.f32 %v995, %v1279
          %v1296 = vsub.f32 %v996, %v1280
          %v1297 = vmul.f32 %v1281, 1.442695
          %v1298 = vpow.pop %v1297
          %v1299 = vmul.f32 %v1282, 1.442695
          %v1300 = vpow.pop %v1299
          %v1301 = vmul.f32 %v1283, 1.442695
          %v1302 = vpow.pop %v1301
          %v1303 = vmul.f32 %v1284, 1.442695
          %v1304 = vpow.pop %v1303
          %v1305 = vmul.f32 %v1285, 1.442695
          %v1306 = vpow.pop %v1305
          %v1307 = vmul.f32 %v1286, 1.442695
          %v1308 = vpow.pop %v1307
          %v1309 = vmul.f32 %v1287, 1.442695
          %v1310 = vpow.pop %v1309
          %v1311 = vmul.f32 %v1288, 1.442695
          %v1312 = vpow.pop %v1311
          %v1313 = vmul.f32 %v1289, 1.442695
          %v1314 = vpow.pop %v1313
          %v1315 = vmul.f32 %v1290, 1.442695
          %v1316 = vpow.pop %v1315
          %v1317 = vmul.f32 %v1291, 1.442695
          %v1318 = vpow.pop %v1317
          %v1319 = vmul.f32 %v1292, 1.442695
          %v1320 = vpow.pop %v1319
          %v1321 = vmul.f32 %v1293, 1.442695
          %v1322 = vpow.pop %v1321
          %v1323 = vmul.f32 %v1294, 1.442695
          %v1324 = vpow.pop %v1323
          %v1325 = vmul.f32 %v1295, 1.442695
          %v1326 = vpow.pop %v1325
          %v1327 = vmul.f32 %v1296, 1.442695
          %v1328 = vpow.pop %v1327
          %v1329 = vsub.f32 %v1217, %v1265
          %v1330 = vsub.f32 %v1218, %v1266
          %v1331 = vsub.f32 %v1219, %v1267
          %v1332 = vsub.f32 %v1220, %v1268
          %v1333 = vsub.f32 %v1221, %v1269
          %v1334 = vsub.f32 %v1222, %v1270
          %v1335 = vsub.f32 %v1223, %v1271
          %v1336 = vsub.f32 %v1224, %v1272
          %v1337 = vsub.f32 %v1225, %v1273
          %v1338 = vsub.f32 %v1226, %v1274
          %v1339 = vsub.f32 %v1227, %v1275
          %v1340 = vsub.f32 %v1228, %v1276
          %v1341 = vsub.f32 %v1229, %v1277
          %v1342 = vsub.f32 %v1230, %v1278
          %v1343 = vsub.f32 %v1231, %v1279
          %v1344 = vsub.f32 %v1232, %v1280
          %v1345 = vmul.f32 %v1329, 1.442695
          %v1346 = vpow.pop %v1345
          %v1347 = vmul.f32 %v1330, 1.442695
          %v1348 = vpow.pop %v1347
          %v1349 = vmul.f32 %v1331, 1.442695
          %v1350 = vpow.pop %v1349
          %v1351 = vmul.f32 %v1332, 1.442695
          %v1352 = vpow.pop %v1351
          %v1353 = vmul.f32 %v1333, 1.442695
          %v1354 = vpow.pop %v1353
          %v1355 = vmul.f32 %v1334, 1.442695
          %v1356 = vpow.pop %v1355
          %v1357 = vmul.f32 %v1335, 1.442695
          %v1358 = vpow.pop %v1357
          %v1359 = vmul.f32 %v1336, 1.442695
          %v1360 = vpow.pop %v1359
          %v1361 = vmul.f32 %v1337, 1.442695
          %v1362 = vpow.pop %v1361
          %v1363 = vmul.f32 %v1338, 1.442695
          %v1364 = vpow.pop %v1363
          %v1365 = vmul.f32 %v1339, 1.442695
          %v1366 = vpow.pop %v1365
          %v1367 = vmul.f32 %v1340, 1.442695
          %v1368 = vpow.pop %v1367
          %v1369 = vmul.f32 %v1341, 1.442695
          %v1370 = vpow.pop %v1369
          %v1371 = vmul.f32 %v1342, 1.442695
          %v1372 = vpow.pop %v1371
          %v1373 = vmul.f32 %v1343, 1.442695
          %v1374 = vpow.pop %v1373
          %v1375 = vmul.f32 %v1344, 1.442695
          %v1376 = vpow.pop %v1375
          %v1377 = vmul.f32 %v1298, %v997
          %v1378 = vmul.f32 %v1300, %v998
          %v1379 = vmul.f32 %v1302, %v999
          %v1380 = vmul.f32 %v1304, %v1000
          %v1381 = vmul.f32 %v1306, %v1001
          %v1382 = vmul.f32 %v1308, %v1002
          %v1383 = vmul.f32 %v1310, %v1003
          %v1384 = vmul.f32 %v1312, %v1004
          %v1385 = vmul.f32 %v1314, %v1005
          %v1386 = vmul.f32 %v1316, %v1006
          %v1387 = vmul.f32 %v1318, %v1007
          %v1388 = vmul.f32 %v1320, %v1008
          %v1389 = vmul.f32 %v1322, %v1009
          %v1390 = vmul.f32 %v1324, %v1010
          %v1391 = vmul.f32 %v1326, %v1011
          %v1392 = vmul.f32 %v1328, %v1012
          %1393 = vadd.xlane.f32.xlu0 %v1346
          %v1394 = vpop.xlane.xlu0 %1393
          %1395 = vadd.xlane.f32.xlu0 %v1348
          %v1396 = vpop.xlane.xlu0 %1395
          %1397 = vadd.xlane.f32.xlu0 %v1350
          %v1398 = vpop.xlane.xlu0 %1397
          %1399 = vadd.xlane.f32.xlu0 %v1352
          %v1400 = vpop.xlane.xlu0 %1399
          %1401 = vadd.xlane.f32.xlu0 %v1354
          %v1402 = vpop.xlane.xlu0 %1401
          %1403 = vadd.xlane.f32.xlu0 %v1356
          %v1404 = vpop.xlane.xlu0 %1403
          %1405 = vadd.xlane.f32.xlu0 %v1358
          %v1406 = vpop.xlane.xlu0 %1405
          %1407 = vadd.xlane.f32.xlu0 %v1360
          %v1408 = vpop.xlane.xlu0 %1407
          %1409 = vadd.xlane.f32.xlu0 %v1362
          %v1410 = vpop.xlane.xlu0 %1409
          %1411 = vadd.xlane.f32.xlu0 %v1364
          %v1412 = vpop.xlane.xlu0 %1411
          %1413 = vadd.xlane.f32.xlu0 %v1366
          %v1414 = vpop.xlane.xlu0 %1413
          %1415 = vadd.xlane.f32.xlu0 %v1368
          %v1416 = vpop.xlane.xlu0 %1415
          %1417 = vadd.xlane.f32.xlu0 %v1370
          %v1418 = vpop.xlane.xlu0 %1417
          %1419 = vadd.xlane.f32.xlu0 %v1372
          %v1420 = vpop.xlane.xlu0 %1419
          %1421 = vadd.xlane.f32.xlu0 %v1374
          %v1422 = vpop.xlane.xlu0 %1421
          %1423 = vadd.xlane.f32.xlu0 %v1376
          %v1424 = vpop.xlane.xlu0 %1423
          %v1425 = vadd.f32 %v1377, %v1394
          %v1426 = vadd.f32 %v1378, %v1396
          %v1427 = vadd.f32 %v1379, %v1398
          %v1428 = vadd.f32 %v1380, %v1400
          %v1429 = vadd.f32 %v1381, %v1402
          %v1430 = vadd.f32 %v1382, %v1404
          %v1431 = vadd.f32 %v1383, %v1406
          %v1432 = vadd.f32 %v1384, %v1408
          %v1433 = vadd.f32 %v1385, %v1410
          %v1434 = vadd.f32 %v1386, %v1412
          %v1435 = vadd.f32 %v1387, %v1414
          %v1436 = vadd.f32 %v1388, %v1416
          %v1437 = vadd.f32 %v1389, %v1418
          %v1438 = vadd.f32 %v1390, %v1420
          %v1439 = vadd.f32 %v1391, %v1422
          %v1440 = vadd.f32 %v1392, %v1424
          %v1441 = vmul.f32 %v1298, %v1013
          %v1442 = vmul.f32 %v1300, %v1014
          %v1443 = vmul.f32 %v1302, %v1015
          %v1444 = vmul.f32 %v1304, %v1016
          %v1445 = vmul.f32 %v1306, %v1017
          %v1446 = vmul.f32 %v1308, %v1018
          %v1447 = vmul.f32 %v1310, %v1019
          %v1448 = vmul.f32 %v1312, %v1020
          %v1449 = vmul.f32 %v1314, %v1021
          %v1450 = vmul.f32 %v1316, %v1022
          %v1451 = vmul.f32 %v1318, %v1023
          %v1452 = vmul.f32 %v1320, %v1024
          %v1453 = vmul.f32 %v1322, %v1025
          %v1454 = vmul.f32 %v1324, %v1026
          %v1455 = vmul.f32 %v1326, %v1027
          %v1456 = vmul.f32 %v1328, %v1028
          %v1457 = vpack.c.bf16 %v1348, %v1346
          %v1458 = vpack.c.bf16 %v1352, %v1350
          %v1459 = vpack.c.bf16 %v1356, %v1354
          %v1460 = vpack.c.bf16 %v1360, %v1358
          %v1461 = vpack.c.bf16 %v1364, %v1362
          %v1462 = vpack.c.bf16 %v1368, %v1366
          %v1463 = vpack.c.bf16 %v1372, %v1370
          %v1464 = vpack.c.bf16 %v1376, %v1374
          %1465 = vmatprep.subr.bf16.mxu0 0
          %1466 = vmatpush1.bf16.msra.mxu0 %v1044
          %1467 = vmatprep.subr.bf16.mxu0 0
          %1468 = vmatpush1.bf16.msra.mxu0 %v1045
          %1469 = vmatprep.subr.bf16.mxu0 0
          %1470 = vmatpush1.bf16.msra.mxu0 %v1046
          %1471 = vmatprep.subr.bf16.mxu0 0
          %1472 = vmatpush1.bf16.msra.mxu0 %v1047
          %1473 = vmatprep.subr.bf16.mxu0 0
          %1474 = vmatpush1.bf16.msra.mxu0 %v1048
          %1475 = vmatprep.subr.bf16.mxu0 0
          %1476 = vmatpush1.bf16.msra.mxu0 %v1049
          %1477 = vmatprep.subr.bf16.mxu0 0
          %1478 = vmatpush1.bf16.msra.mxu0 %v1050
          %1479 = vmatprep.subr.bf16.mxu0 0
          %1480 = vmatpush1.bf16.msra.mxu0 %v1051
          %1481 = vmatprep.subr.bf16.mxu0 0
          %1482 = vmatpush1.bf16.msra.mxu0 0
          %1483 = vmatprep.subr.bf16.mxu0 0
          %1484 = vmatpush1.bf16.msra.mxu0 0
          %1485 = vmatprep.subr.bf16.mxu0 0
          %1486 = vmatpush1.bf16.msra.mxu0 0
          %1487 = vmatprep.subr.bf16.mxu0 0
          %1488 = vmatpush1.bf16.msra.mxu0 0
          %1489 = vmatprep.subr.bf16.mxu0 0
          %1490 = vmatpush1.bf16.msra.mxu0 0
          %1491 = vmatprep.subr.bf16.mxu0 0
          %1492 = vmatpush1.bf16.msra.mxu0 0
          %1493 = vmatprep.subr.bf16.mxu0 0
          %1494 = vmatpush1.bf16.msra.mxu0 0
          %1495 = vmatprep.subr.bf16.mxu0 0
          %1496 = vmatpush1.bf16.msra.mxu0 0
          %1497 = vmatprep.mubr.bf16.mxu0 0
          %1498 = vmatmul.mubr.bf16.gmra.mrb[0].mxu0 %v1457
          %v1499 = vpop.f32.mrb[0].mxu0
          %v1500 = vadd.f32 0.0, %v1499
          %v1501 = vpop.f32.mrb[0].mxu0
          %v1502 = vpop.f32.mrb[0].mxu0
          %v1503 = vadd.f32 0.0, %v1502
          %v1504 = vpop.f32.mrb[0].mxu0
          %1505 = vmatprep.mubr.bf16.mxu0 0
          %1506 = vmatmul.mubr.bf16.gmra.mrb[0].mxu0 %v1458
          %v1507 = vpop.f32.mrb[0].mxu0
          %v1508 = vadd.f32 0.0, %v1507
          %v1509 = vpop.f32.mrb[0].mxu0
          %v1510 = vpop.f32.mrb[0].mxu0
          %v1511 = vadd.f32 0.0, %v1510
          %v1512 = vpop.f32.mrb[0].mxu0
          %1513 = vmatprep.mubr.bf16.mxu0 0
          %1514 = vmatmul.mubr.bf16.gmra.mrb[0].mxu0 %v1459
          %v1515 = vpop.f32.mrb[0].mxu0
          %v1516 = vadd.f32 0.0, %v1515
          %v1517 = vpop.f32.mrb[0].mxu0
          %v1518 = vpop.f32.mrb[0].mxu0
          %v1519 = vadd.f32 0.0, %v1518
          %v1520 = vpop.f32.mrb[0].mxu0
          %1521 = vmatprep.mubr.bf16.mxu0 0
          %1522 = vmatmul.mubr.bf16.gmra.mrb[0].mxu0 %v1460
          %v1523 = vpop.f32.mrb[0].mxu0
          %v1524 = vadd.f32 0.0, %v1523
          %v1525 = vpop.f32.mrb[0].mxu0
          %v1526 = vpop.f32.mrb[0].mxu0
          %v1527 = vadd.f32 0.0, %v1526
          %v1528 = vpop.f32.mrb[0].mxu0
          %1529 = vmatprep.mubr.bf16.mxu0 0
          %1530 = vmatmul.mubr.bf16.gmra.mrb[0].mxu0 %v1461
          %v1531 = vpop.f32.mrb[0].mxu0
          %v1532 = vadd.f32 0.0, %v1531
          %v1533 = vpop.f32.mrb[0].mxu0
          %v1534 = vpop.f32.mrb[0].mxu0
          %v1535 = vadd.f32 0.0, %v1534
          %v1536 = vpop.f32.mrb[0].mxu0
          %1537 = vmatprep.mubr.bf16.mxu0 0
          %1538 = vmatmul.mubr.bf16.gmra.mrb[0].mxu0 %v1462
          %v1539 = vpop.f32.mrb[0].mxu0
          %v1540 = vadd.f32 0.0, %v1539
          %v1541 = vpop.f32.mrb[0].mxu0
          %v1542 = vpop.f32.mrb[0].mxu0
          %v1543 = vadd.f32 0.0, %v1542
          %v1544 = vpop.f32.mrb[0].mxu0
          %1545 = vmatprep.mubr.bf16.mxu0 0
          %1546 = vmatmul.mubr.bf16.gmra.mrb[0].mxu0 %v1463
          %v1547 = vpop.f32.mrb[0].mxu0
          %v1548 = vadd.f32 0.0, %v1547
          %v1549 = vpop.f32.mrb[0].mxu0
          %v1550 = vpop.f32.mrb[0].mxu0
          %v1551 = vadd.f32 0.0, %v1550
          %v1552 = vpop.f32.mrb[0].mxu0
          %1553 = vmatprep.mubr.bf16.mxu0 0
          %1554 = vmatmul.mubr.bf16.gmra.mrb[0].mxu0 %v1464
          %v1555 = vpop.f32.mrb[0].mxu0
          %v1556 = vadd.f32 0.0, %v1555
          %v1557 = vpop.f32.mrb[0].mxu0
          %v1558 = vpop.f32.mrb[0].mxu0
          %v1559 = vadd.f32 0.0, %v1558
          %v1560 = vpop.f32.mrb[0].mxu0
          %1561 = vdwg.mxu0
          %v1562 = vadd.f32 %v1441, %v1500
          %v1563 = vadd.f32 %v1442, %v1503
          %v1564 = vadd.f32 %v1443, %v1508
          %v1565 = vadd.f32 %v1444, %v1511
          %v1566 = vadd.f32 %v1445, %v1516
          %v1567 = vadd.f32 %v1446, %v1519
          %v1568 = vadd.f32 %v1447, %v1524
          %v1569 = vadd.f32 %v1448, %v1527
          %v1570 = vadd.f32 %v1449, %v1532
          %v1571 = vadd.f32 %v1450, %v1535
          %v1572 = vadd.f32 %v1451, %v1540
          %v1573 = vadd.f32 %v1452, %v1543
          %v1574 = vadd.f32 %v1453, %v1548
          %v1575 = vadd.f32 %v1454, %v1551
          %v1576 = vadd.f32 %v1455, %v1556
          %v1577 = vadd.f32 %v1456, %v1559
        $region37: #{tpu_custom_call.1} parent=27 // loop_footer
          %s978 = sadd.s32 %s976, 1
        $region38: #{tpu_custom_call.1} parent=27 // loop_footer_branch
          %975 = sbr.rel target = $region34
        $region39: #{tpu_custom_call.1} parent=27 // loop_exit
          _
        %v1578 = vrcp.pop %v997
        %v1579 = vrcp.pop %v998
        %v1580 = vrcp.pop %v999
        %v1581 = vrcp.pop %v1000
        %v1582 = vrcp.pop %v1001
        %v1583 = vrcp.pop %v1002
        %v1584 = vrcp.pop %v1003
        %v1585 = vrcp.pop %v1004
        %v1586 = vrcp.pop %v1005
        %v1587 = vrcp.pop %v1006
        %v1588 = vrcp.pop %v1007
        %v1589 = vrcp.pop %v1008
        %v1590 = vrcp.pop %v1009
        %v1591 = vrcp.pop %v1010
        %v1592 = vrcp.pop %v1011
        %v1593 = vrcp.pop %v1012
        %v1594 = vmul.f32 %v1013, %v1578
        %v1595 = vmul.f32 %v1014, %v1579
        %v1596 = vmul.f32 %v1015, %v1580
        %v1597 = vmul.f32 %v1016, %v1581
        %v1598 = vmul.f32 %v1017, %v1582
        %v1599 = vmul.f32 %v1018, %v1583
        %v1600 = vmul.f32 %v1019, %v1584
        %v1601 = vmul.f32 %v1020, %v1585
        %v1602 = vmul.f32 %v1021, %v1586
        %v1603 = vmul.f32 %v1022, %v1587
        %v1604 = vmul.f32 %v1023, %v1588
        %v1605 = vmul.f32 %v1024, %v1589
        %v1606 = vmul.f32 %v1025, %v1590
        %v1607 = vmul.f32 %v1026, %v1591
        %v1608 = vmul.f32 %v1027, %v1592
        %v1609 = vmul.f32 %v1028, %v1593
        %1610 = vst.msk [vmem:[%s191] sm:$0xff] %vm913, %v1594
        %1611 = vst.msk [vmem:[%s191 + $0x8] sm:$0xff] %vm913, %v1595
        %1612 = vst.msk [vmem:[%s191 + $0x10] sm:$0xff] %vm913, %v1596
        %1613 = vst.msk [vmem:[%s191 + $0x18] sm:$0xff] %vm913, %v1597
        %1614 = vst.msk [vmem:[%s191 + $0x20] sm:$0xff] %vm913, %v1598
        %1615 = vst.msk [vmem:[%s191 + $0x28] sm:$0xff] %vm913, %v1599
        %1616 = vst.msk [vmem:[%s191 + $0x30] sm:$0xff] %vm913, %v1600
        %1617 = vst.msk [vmem:[%s191 + $0x38] sm:$0xff] %vm913, %v1601
        %1618 = vst.msk [vmem:[%s191 + $0x40] sm:$0xff] %vm913, %v1602
        %1619 = vst.msk [vmem:[%s191 + $0x48] sm:$0xff] %vm913, %v1603
        %1620 = vst.msk [vmem:[%s191 + $0x50] sm:$0xff] %vm913, %v1604
        %1621 = vst.msk [vmem:[%s191 + $0x58] sm:$0xff] %vm913, %v1605
        %1622 = vst.msk [vmem:[%s191 + $0x60] sm:$0xff] %vm913, %v1606
        %1623 = vst.msk [vmem:[%s191 + $0x68] sm:$0xff] %vm913, %v1607
        %1624 = vst.msk [vmem:[%s191 + $0x70] sm:$0xff] %vm913, %v1608
        %1625 = vst.msk [vmem:[%s191 + $0x78] sm:$0xff] %vm913, %v1609
        %s1626 = smul.u32 16, %s21
        %p1627 = scmp.lt.s32.totalorder %s20, 1
        %s1628 = scalar_select %p1627, %s20, 1
        %p1629 = scmp.lt.s32.totalorder %s1626, 31
        %s1630 = scalar_select %p1629, %s1626, 31
        %s1631 = smul.addr %s1628, 32
        %s1632 = sadd.s32 %s1630, %s1631
        %s1633 = smul.addr %s1632, 8
        %s1634 = scalar_lea.vmem %s2, %s1633
        // Predicated region
        $region40: #{tpu_custom_call.1} parent=27 // pred_check
          %p1635 = pneg %p97
        $region41: #{tpu_custom_call.1} parent=27 // pred_check_branch
          %1637 = sbr.rel (%p1635) target = $region43
        $region42: #{tpu_custom_call.1} parent=27 // pred_region
          %s1638 = smul.u32 16, %s21
        $region43: #{tpu_custom_call.1} parent=27 // pred_fallthru
          _
      $region28: #{tpu_custom_call.1} parent=5 // pred_fallthru
        _
      %p1639 = scmp.le.s32.totalorder 2, %s11
      // Predicated region
      $region44: #{tpu_custom_call.1} parent=5 // pred_check
        %p1640 = pneg %p1639
      $region45: #{tpu_custom_call.1} parent=5 // pred_check_branch
        %1642 = sbr.rel (%p1640) target = $region47
      $region46: #{tpu_custom_call.1} parent=5 // pred_region
        %s1643 = ssub.s32 %s11, 2
        // Predicated region
        $region48: #{tpu_custom_call.1} parent=46 // pred_check
          %p1644 = pneg %p103
        $region49: #{tpu_custom_call.1} parent=46 // pred_check_branch
          %1646 = sbr.rel (%p1644) target = $region51
        $region50: #{tpu_custom_call.1} parent=46 // pred_region
          %s1647 = smul.u32 16, %s23
          %p1648 = scmp.lt.s32.totalorder %s22, 1
          %s1649 = scalar_select %p1648, %s22, 1
          %p1650 = scmp.lt.s32.totalorder %s1647, 31
          %s1651 = scalar_select %p1650, %s1647, 31
          %s1652 = smul.addr %s1649, 32
          %s1653 = sadd.s32 %s1651, %s1652
          %s1654 = smul.addr %s1653, 8
          %s1655 = scalar_lea.vmem %s2, %s1654
        $region51: #{tpu_custom_call.1} parent=46 // pred_fallthru
          _
      $region47: #{tpu_custom_call.1} parent=5 // pred_fallthru
        _
    $region6: #{tpu_custom_call.1} parent=1 // loop_footer
      %s15 = sadd.s32 1, %s11
    $region7: #{tpu_custom_call.1} parent=1 // loop_footer_branch
      %10 = sbr.rel target = $region3
    $region8: #{tpu_custom_call.1} parent=1 // loop_exit
      _
    %1656 = vsyncpa [#allocation5], 1
    %s1657 = scalar_lea.sflag [#allocation5], 1
    %1658 = vsyncpa %s1657, 1

</llo_original>
